<compile_context>
chip_gen: v6e
topology: v6e:2x2x1
jax: 0.10.0
libtpu: 0.0.40
codegen_flags: <defaults>
</compile_context>

<pallas_src>
import math
from functools import partial

import jax
import jax.numpy as jnp
from jax.experimental import pallas as pl
from jax.experimental.pallas import tpu as pltpu


# ---------------------------------------------------------------------------
# Kernel
# ---------------------------------------------------------------------------
def _attention_layer_ds_kernel(
    xq_ref, xk_ref, xv_ref,
    wq_ref, bq_ref, wk_ref, bk_ref, wv_ref, bv_ref, wo_ref, bo_ref,
    out_ref, *rest,
    n_heads, d_keys, d_values, tbn, C, return_attn,
):
    if return_attn:
        attn_ref, av_ref = rest
    else:
        (av_ref,) = rest

    R = tbn * C

    xq = xq_ref[...].astype(jnp.bfloat16)
    xk = xk_ref[...].astype(jnp.bfloat16)
    xv = xv_ref[...].astype(jnp.bfloat16)

    # Fused, full-width Q/K/V projections: one MXU matmul each with output
    # width H*d_k (full lane utilization).  1/sqrt(d_k) is pre-folded into
    # wq/bq by the wrapper.  f32 accumulation, bias added in f32.
    q = (jnp.dot(xq, wq_ref[...], preferred_element_type=jnp.float32)
         + bq_ref[...]).astype(jnp.bfloat16)
    k = (jnp.dot(xk, wk_ref[...], preferred_element_type=jnp.float32)
         + bk_ref[...]).astype(jnp.bfloat16)
    v = (jnp.dot(xv, wv_ref[...], preferred_element_type=jnp.float32)
         + bv_ref[...]).astype(jnp.bfloat16)

    # Per-head attention core (small (C, C) problems); H is small so a static
    # unroll is cheap now that all large matmuls are hoisted out of the loop.
    for h in range(n_heads):
        qh = q[:, h * d_keys:(h + 1) * d_keys].reshape(tbn, C, d_keys)
        kh = k[:, h * d_keys:(h + 1) * d_keys].reshape(tbn, C, d_keys)
        vh = v[:, h * d_values:(h + 1) * d_values].reshape(tbn, C, d_values)

        s = jnp.einsum('tce,tse->tcs', qh, kh,
                       preferred_element_type=jnp.float32)           # (tbn, C, C)
        m = jnp.max(s, axis=-1, keepdims=True)
        p = jnp.exp(s - m)
        a = p / jnp.sum(p, axis=-1, keepdims=True)                    # exact softmax

        if return_attn:
            attn_ref[:, h, :, :] = a.astype(attn_ref.dtype)

        av = jnp.einsum('tcs,tsd->tcd', a.astype(jnp.bfloat16), vh,
                        preferred_element_type=jnp.float32)           # (tbn, C, dv)
        # Pack this head into the (R, H*dv) slab so the output projection is a
        # single full-depth MXU matmul instead of H narrow ones + VPU adds.
        av_ref[:, h * d_values:(h + 1) * d_values] = av.reshape(R, d_values)

    y = jnp.dot(av_ref[...].astype(jnp.bfloat16), wo_ref[...],
                preferred_element_type=jnp.float32)
    out_ref[...] = (y + bo_ref[...]).astype(out_ref.dtype)


# ---------------------------------------------------------------------------
# Generation-aware tiling
# ---------------------------------------------------------------------------
def _vmem_capacity_bytes():
    """Physical per-core VMEM; conservative fallback if the query is unavailable."""
    try:
        cap = getattr(pltpu.get_tpu_info(), "vmem_capacity_bytes", None)
        if cap:
            return int(cap)
    except Exception:
        pass
    return 64 * 1024 * 1024  # conservative (v7x-sized) fallback


def _pad8(n):
    return -(-n // 8) * 8


def _pad128(n):
    return -(-n // 128) * 128


def _step_vmem_bytes(tbn, C, d_model, H, d_keys, d_values,
                     in_bytes, out_bytes, attn_bytes, return_attn):
    """Rough per-grid-step VMEM footprint: pipelined blocks + scratch + temps."""
    R = tbn * C
    rows, dm = _pad8(R), _pad128(d_model)
    b = 0
    b += 2 * 3 * rows * dm * in_bytes                      # xq/xk/xv blocks (2x buffered)
    b += 2 * rows * dm * out_bytes                         # out block (2x buffered)
    if return_attn:
        b += 2 * tbn * H * _pad8(C) * _pad128(C) * attn_bytes
    b += rows * _pad128(H * d_values) * 4                  # AV slab scratch (f32)
    b += 3 * rows * dm * 2                                 # bf16 copies of x
    b += (2 * rows * _pad128(H * d_keys) + rows * _pad128(H * d_values)) * 2  # q/k/v bf16
    b += rows * dm * 4                                     # y accumulator (f32)
    b += 4 * tbn * _pad8(C) * _pad128(C) * 4               # s/p/a per-head temporaries
    return b


def _weight_vmem_bytes(d_model, H, d_keys, d_values):
    dm = _pad8(d_model)
    w = (2 * dm * _pad128(H * d_keys) * 2                  # wq, wk (bf16)
         + dm * _pad128(H * d_values) * 2                  # wv (bf16)
         + _pad8(H * d_values) * _pad128(d_model) * 2)     # wo (bf16)
    bias = 8 * (2 * _pad128(H * d_keys) + _pad128(H * d_values) + _pad128(d_model)) * 4
    return 2 * (w + bias)                                  # default double-buffering


def _choose_tbn(BN, C, d_model, H, d_keys, d_values,
                in_bytes, out_bytes, attn_bytes, return_attn, rows_target=1024):
    """Pick how many (b, n) tiles each grid step processes."""
    cap = _vmem_capacity_bytes()
    budget = int(0.55 * cap) - _weight_vmem_bytes(d_model, H, d_keys, d_values)
    budget = max(budget, 2 * 1024 * 1024)

    def step_bytes(d):
        return _step_vmem_bytes(d, C, d_model, H, d_keys, d_values,
                                in_bytes, out_bytes, attn_bytes, return_attn)

    divisors = [d for d in range(1, BN + 1) if BN % d == 0]
    fits = [d for d in divisors
            if d * C <= max(rows_target, C) and step_bytes(d) <= budget]
    if not fits:
        fits = [1]
    # Sublane-friendly block heights: (tbn*C) % 8 == 0 keeps the in-kernel
    # (R, d) -> (tbn, C, d) reshapes layout-free.
    pool = [d for d in fits if (d * C) % 8 == 0]
    if not pool:
        # Full-extent block is always a legal BlockSpec; otherwise take the
        # largest block that fits the budget (correct, possibly relayouts).
        pool = [BN] if step_bytes(BN) <= budget else fits
    # Prefer >= 4 grid steps (v7x megacore sharding + DMA/compute overlap),
    # then >= 2, then whatever is left.
    for min_steps in (4, 2, 1):
        cand = [d for d in pool if BN // d >= min_steps]
        if cand:
            return max(cand)
    return 1


# ---------------------------------------------------------------------------
# Wrapper
# ---------------------------------------------------------------------------
def attention_layer_ds(queries, keys, values, params, n_heads, *,
                       return_attn=True, attn_dtype=jnp.float32):
    """Pallas implementation of AttentionLayer_DS.forward.

    attn_mask / tau / delta of the original forward are ignored (the DS inner
    attention does not use them).  Set return_attn=False to skip the attention
    writeback, or attn_dtype=jnp.bfloat16 to halve its HBM traffic.
    """
    B, N, C, d_model = queries.shape
    wq, bq, wk, bk, wv, bv, wo, bo = params
    H = n_heads
    d_keys = wq.shape[1] // H
    d_values = wv.shape[1] // H
    BN = B * N
    scale = 1.0 / math.sqrt(d_keys)

    # Flatten (B, N, C) -> rows (leading-dim reshape, free).
    q2 = queries.reshape(BN * C, d_model)
    k2 = keys.reshape(BN * C, d_model)
    v2 = values.reshape(BN * C, d_model)

    # Full-width (fused-over-heads) weights, bf16 for the MXU; the softmax
    # scale is folded into the query projection (weights and bias).
    wq_f = (wq * scale).astype(jnp.bfloat16)
    wk_f = wk.astype(jnp.bfloat16)
    wv_f = wv.astype(jnp.bfloat16)
    wo_f = wo.astype(jnp.bfloat16)
    bq_f = (bq * scale).astype(jnp.float32).reshape(1, H * d_keys)
    bk_f = bk.astype(jnp.float32).reshape(1, H * d_keys)
    bv_f = bv.astype(jnp.float32).reshape(1, H * d_values)
    bo_f = bo.astype(jnp.float32).reshape(1, d_model)

    in_bytes = q2.dtype.itemsize
    out_bytes = queries.dtype.itemsize
    attn_bytes = jnp.dtype(attn_dtype).itemsize if return_attn else 0

    tbn = _choose_tbn(BN, C, d_model, H, d_keys, d_values,
                      in_bytes, out_bytes, attn_bytes, return_attn)
    grid = (BN // tbn,)
    R = tbn * C

    kernel = partial(
        _attention_layer_ds_kernel,
        n_heads=H, d_keys=d_keys, d_values=d_values,
        tbn=tbn, C=C, return_attn=return_attn,
    )

    x_spec = pl.BlockSpec((R, d_model), lambda i: (i, 0))
    full = lambda arr: pl.BlockSpec(arr.shape, lambda i: (0,) * arr.ndim)

    out_shape = [jax.ShapeDtypeStruct((BN * C, d_model), queries.dtype)]
    out_specs = [pl.BlockSpec((R, d_model), lambda i: (i, 0))]
    if return_attn:
        out_shape.append(jax.ShapeDtypeStruct((BN, H, C, C), attn_dtype))
        out_specs.append(pl.BlockSpec((tbn, H, C, C), lambda i: (i, 0, 0, 0)))

    # Advisory cost estimate so XLA schedules around the custom call sensibly.
    flops = 2 * BN * C * (d_model * H * (2 * d_keys + d_values)
                          + H * C * (d_keys + d_values)
                          + H * d_values * d_model)
    transcendentals = BN * H * C * C
    bytes_accessed = (3 * BN * C * d_model * in_bytes
                      + BN * C * d_model * out_bytes
                      + BN * H * C * C * attn_bytes
                      + 2 * (wq_f.size + wk_f.size + wv_f.size + wo_f.size)
                      + 4 * (bq_f.size + bk_f.size + bv_f.size + bo_f.size))

    cap = _vmem_capacity_bytes()
    vmem_limit = max(32 * 1024 * 1024, min(int(0.75 * cap), 100 * 1024 * 1024))

    results = pl.pallas_call(
        kernel,
        out_shape=tuple(out_shape),
        grid_spec=pltpu.PrefetchScalarGridSpec(
            num_scalar_prefetch=0,
            grid=grid,
            in_specs=[
                x_spec, x_spec, x_spec,
                full(wq_f), full(bq_f), full(wk_f), full(bk_f),
                full(wv_f), full(bv_f), full(wo_f), full(bo_f),
            ],
            out_specs=tuple(out_specs),
            scratch_shapes=[pltpu.VMEM((R, H * d_values), jnp.float32)],
        ),
        compiler_params=pltpu.CompilerParams(
            dimension_semantics=("parallel",),
            vmem_limit_bytes=int(vmem_limit),
        ),
        cost_estimate=pl.CostEstimate(
            flops=int(flops),
            transcendentals=int(transcendentals),
            bytes_accessed=int(bytes_accessed),
        ),
    )(q2, k2, v2, wq_f, bq_f, wk_f, bk_f, wv_f, bv_f, wo_f, bo_f)

    out = results[0].reshape(B, N, C, d_model)
    if not return_attn:
        return out, None
    attn = results[1].reshape(B, N, H, C, C)
    return out, attn


# ---------------------------------------------------------------------------
# Pure-JAX reference + test
# ---------------------------------------------------------------------------
def _reference(queries, keys, values, params, n_heads):
    """Pure-JAX (f32) reference for correctness checking."""
    B, N, C, d_model = queries.shape
    wq, bq, wk, bk, wv, bv, wo, bo = params
    H = n_heads
    d_keys = wq.shape[1] // H
    d_values = wv.shape[1] // H

    q = (queries @ wq + bq[0]).reshape(B, N, C, H, d_keys)
    k = (keys @ wk + bk[0]).reshape(B, N, C, H, d_keys)
    v = (values @ wv + bv[0]).reshape(B, N, C, H, d_values)

    scale = 1.0 / math.sqrt(d_keys)
    scores = jnp.einsum('bnche,bnshe->bnhcs', q, k) * scale
    attn = jax.nn.softmax(scores, axis=-1)
    out = jnp.einsum('bnhcs,bnshd->bnchd', attn, v).reshape(B, N, C, H * d_values)
    out = out @ wo + bo[0]
    return out, attn


if __name__ == "__main__":
    B, N, C, d_model, H = 2, 2, 8, 32, 4
    d_keys = d_model // H
    d_values = d_model // H

    key = jax.random.PRNGKey(0)
    ks = jax.random.split(key, 16)

    # Deterministic parameter init (PyTorch nn.Linear shapes, stored as (in, out) / (1, out)).
    def lin_init(kw, kb, fan_in, fan_out):
        bound = 1.0 / math.sqrt(fan_in)
        w = jax.random.uniform(kw, (fan_in, fan_out), jnp.float32, -bound, bound)
        b = jax.random.uniform(kb, (1, fan_out), jnp.float32, -bound, bound)
        return w, b

    wq, bq = lin_init(ks[0], ks[1], d_model, d_keys * H)
    wk, bk = lin_init(ks[2], ks[3], d_model, d_keys * H)
    wv, bv = lin_init(ks[4], ks[5], d_model, d_values * H)
    wo, bo = lin_init(ks[6], ks[7], d_values * H, d_model)
    params = (wq, bq, wk, bk, wv, bv, wo, bo)

    queries = jax.random.normal(ks[8], (B, N, C, d_model), jnp.float32)
    keys = jax.random.normal(ks[9], (B, N, C, d_model), jnp.float32)
    values = jax.random.normal(ks[10], (B, N, C, d_model), jnp.float32)

    out, attn = attention_layer_ds(queries, keys, values, params, H)
    out = jax.block_until_ready(out)
    attn = jax.block_until_ready(attn)

    ref_out, ref_attn = _reference(queries, keys, values, params, H)
    assert out.shape == (B, N, C, d_model)
    assert attn.shape == (B, N, H, C, C)
    # bf16 MXU operands with f32 accumulation -> loosened tolerance vs pure-f32 ref.
    assert jnp.allclose(out, ref_out, atol=2e-2, rtol=2e-2)
    assert jnp.allclose(attn, ref_attn, atol=2e-2, rtol=2e-2)

    # Also exercise the attn-skipping fast path (no attention writeback).
    out2, attn_none = attention_layer_ds(queries, keys, values, params, H,
                                         return_attn=False)
    out2 = jax.block_until_ready(out2)
    assert attn_none is None
    assert jnp.allclose(out2, ref_out, atol=2e-2, rtol=2e-2)

    print("KERNEL_OK")
</pallas_src>

<mosaic_0001>
module attributes {stable_mosaic.version = 11 : i64} {
  func.func @_attention_layer_ds_kernel(%arg0: i32, %arg1: memref<8x32xf32, #tpu.memory_space<vmem>>, %arg2: memref<8x32xf32, #tpu.memory_space<vmem>>, %arg3: memref<8x32xf32, #tpu.memory_space<vmem>>, %arg4: memref<32x32xbf16, #tpu.memory_space<vmem>>, %arg5: memref<1x32xf32, #tpu.memory_space<vmem>>, %arg6: memref<32x32xbf16, #tpu.memory_space<vmem>>, %arg7: memref<1x32xf32, #tpu.memory_space<vmem>>, %arg8: memref<32x32xbf16, #tpu.memory_space<vmem>>, %arg9: memref<1x32xf32, #tpu.memory_space<vmem>>, %arg10: memref<32x32xbf16, #tpu.memory_space<vmem>>, %arg11: memref<1x32xf32, #tpu.memory_space<vmem>>, %arg12: memref<8x32xf32, #tpu.memory_space<vmem>>, %arg13: memref<1x4x8x8xf32, #tpu.memory_space<vmem>>, %arg14: memref<8x32xf32, #tpu.memory_space<vmem>>) attributes {dimension_semantics = [#tpu.dimension_semantics<parallel>], iteration_bounds = array<i64: 4>, scalar_prefetch = 0 : i64, scratch_operands = 1 : i64, tpu.core_type = #tpu.core_type<tc>, window_params = [{transform_indices = @transform_0, window_bounds = array<i64: 8, 32>}, {transform_indices = @transform_1, window_bounds = array<i64: 8, 32>}, {transform_indices = @transform_2, window_bounds = array<i64: 8, 32>}, {pipeline_mode = #tpu.pipeline_mode<synchronous>, transform_indices = @transform_3, window_bounds = array<i64: 32, 32>}, {pipeline_mode = #tpu.pipeline_mode<synchronous>, transform_indices = @transform_4, window_bounds = array<i64: 1, 32>}, {pipeline_mode = #tpu.pipeline_mode<synchronous>, transform_indices = @transform_5, window_bounds = array<i64: 32, 32>}, {pipeline_mode = #tpu.pipeline_mode<synchronous>, transform_indices = @transform_6, window_bounds = array<i64: 1, 32>}, {pipeline_mode = #tpu.pipeline_mode<synchronous>, transform_indices = @transform_7, window_bounds = array<i64: 32, 32>}, {pipeline_mode = #tpu.pipeline_mode<synchronous>, transform_indices = @transform_8, window_bounds = array<i64: 1, 32>}, {pipeline_mode = #tpu.pipeline_mode<synchronous>, transform_indices = @transform_9, window_bounds = array<i64: 32, 32>}, {pipeline_mode = #tpu.pipeline_mode<synchronous>, transform_indices = @transform_10, window_bounds = array<i64: 1, 32>}, {transform_indices = @transform_11, window_bounds = array<i64: 8, 32>}, {transform_indices = @transform_12, window_bounds = array<i64: 1, 4, 8, 8>}]} {
    %c0 = arith.constant 0 : index
    %c0_0 = arith.constant 0 : index
    %0 = vector.load %arg1[%c0, %c0_0] : memref<8x32xf32, #tpu.memory_space<vmem>>, vector<8x32xf32>
    %1 = arith.truncf %0 : vector<8x32xf32> to vector<8x32xbf16>
    %c0_1 = arith.constant 0 : index
    %c0_2 = arith.constant 0 : index
    %2 = vector.load %arg2[%c0_1, %c0_2] : memref<8x32xf32, #tpu.memory_space<vmem>>, vector<8x32xf32>
    %3 = arith.truncf %2 : vector<8x32xf32> to vector<8x32xbf16>
    %c0_3 = arith.constant 0 : index
    %c0_4 = arith.constant 0 : index
    %4 = vector.load %arg3[%c0_3, %c0_4] : memref<8x32xf32, #tpu.memory_space<vmem>>, vector<8x32xf32>
    %5 = arith.truncf %4 : vector<8x32xf32> to vector<8x32xbf16>
    %c0_5 = arith.constant 0 : index
    %c0_6 = arith.constant 0 : index
    %6 = vector.load %arg4[%c0_5, %c0_6] : memref<32x32xbf16, #tpu.memory_space<vmem>>, vector<32x32xbf16>
    %cst = arith.constant dense<0.000000e+00> : vector<8x32xf32>
    %7 = tpu.matmul %1, %6, %cst {dimension_numbers = #tpu.dot_dimension_numbers<[1], [0], [0], [1], [0, 0, 1, 1], [], []>} : vector<8x32xbf16>, vector<32x32xbf16>, vector<8x32xf32> -> vector<8x32xf32>
    %c0_7 = arith.constant 0 : index
    %c0_8 = arith.constant 0 : index
    %8 = vector.load %arg5[%c0_7, %c0_8] : memref<1x32xf32, #tpu.memory_space<vmem>>, vector<1x32xf32>
    %9 = vector.broadcast %8 : vector<1x32xf32> to vector<8x32xf32>
    %10 = arith.addf %7, %9 : vector<8x32xf32>
    %11 = arith.truncf %10 : vector<8x32xf32> to vector<8x32xbf16>
    %c0_9 = arith.constant 0 : index
    %c0_10 = arith.constant 0 : index
    %12 = vector.load %arg6[%c0_9, %c0_10] : memref<32x32xbf16, #tpu.memory_space<vmem>>, vector<32x32xbf16>
    %cst_11 = arith.constant dense<0.000000e+00> : vector<8x32xf32>
    %13 = tpu.matmul %3, %12, %cst_11 {dimension_numbers = #tpu.dot_dimension_numbers<[1], [0], [0], [1], [0, 0, 1, 1], [], []>} : vector<8x32xbf16>, vector<32x32xbf16>, vector<8x32xf32> -> vector<8x32xf32>
    %c0_12 = arith.constant 0 : index
    %c0_13 = arith.constant 0 : index
    %14 = vector.load %arg7[%c0_12, %c0_13] : memref<1x32xf32, #tpu.memory_space<vmem>>, vector<1x32xf32>
    %15 = vector.broadcast %14 : vector<1x32xf32> to vector<8x32xf32>
    %16 = arith.addf %13, %15 : vector<8x32xf32>
    %17 = arith.truncf %16 : vector<8x32xf32> to vector<8x32xbf16>
    %c0_14 = arith.constant 0 : index
    %c0_15 = arith.constant 0 : index
    %18 = vector.load %arg8[%c0_14, %c0_15] : memref<32x32xbf16, #tpu.memory_space<vmem>>, vector<32x32xbf16>
    %cst_16 = arith.constant dense<0.000000e+00> : vector<8x32xf32>
    %19 = tpu.matmul %5, %18, %cst_16 {dimension_numbers = #tpu.dot_dimension_numbers<[1], [0], [0], [1], [0, 0, 1, 1], [], []>} : vector<8x32xbf16>, vector<32x32xbf16>, vector<8x32xf32> -> vector<8x32xf32>
    %c0_17 = arith.constant 0 : index
    %c0_18 = arith.constant 0 : index
    %20 = vector.load %arg9[%c0_17, %c0_18] : memref<1x32xf32, #tpu.memory_space<vmem>>, vector<1x32xf32>
    %21 = vector.broadcast %20 : vector<1x32xf32> to vector<8x32xf32>
    %22 = arith.addf %19, %21 : vector<8x32xf32>
    %23 = arith.truncf %22 : vector<8x32xf32> to vector<8x32xbf16>
    %24 = vector.extract_strided_slice %11 {offsets = [0, 0], sizes = [8, 8], strides = [1, 1]} : vector<8x32xbf16> to vector<8x8xbf16>
    %25 = vector.shape_cast %24 : vector<8x8xbf16> to vector<1x8x8xbf16>
    %26 = vector.extract_strided_slice %17 {offsets = [0, 0], sizes = [8, 8], strides = [1, 1]} : vector<8x32xbf16> to vector<8x8xbf16>
    %27 = vector.shape_cast %26 : vector<8x8xbf16> to vector<1x8x8xbf16>
    %28 = vector.extract_strided_slice %23 {offsets = [0, 0], sizes = [8, 8], strides = [1, 1]} : vector<8x32xbf16> to vector<8x8xbf16>
    %29 = vector.shape_cast %28 : vector<8x8xbf16> to vector<1x8x8xbf16>
    "tpu.trace_start"() <{level = 10 : i32, message = "tce,tse->tcs"}> : () -> ()
    %cst_19 = arith.constant dense<0.000000e+00> : vector<1x8x8xf32>
    %30 = tpu.matmul %25, %27, %cst_19 {dimension_numbers = #tpu.dot_dimension_numbers<[2], [2], [1], [1], [0, 0, 0, 1, 1, 1], [0], [0]>} : vector<1x8x8xbf16>, vector<1x8x8xbf16>, vector<1x8x8xf32> -> vector<1x8x8xf32>
    "tpu.trace_stop"() : () -> ()
    %cst_20 = arith.constant dense<0xFF800000> : vector<1x8xf32>
    %31 = vector.multi_reduction <maximumf>, %30, %cst_20 [2] : vector<1x8x8xf32> to vector<1x8xf32>
    %32 = vector.shape_cast %31 : vector<1x8xf32> to vector<1x8x1xf32>
    %33 = vector.broadcast %32 : vector<1x8x1xf32> to vector<1x8x8xf32>
    %34 = arith.subf %30, %33 : vector<1x8x8xf32>
    %35 = math.exp %34 : vector<1x8x8xf32>
    %cst_21 = arith.constant dense<0.000000e+00> : vector<1x8xf32>
    %36 = vector.multi_reduction <add>, %35, %cst_21 [2] : vector<1x8x8xf32> to vector<1x8xf32>
    %37 = vector.shape_cast %36 : vector<1x8xf32> to vector<1x8x1xf32>
    %38 = vector.broadcast %37 : vector<1x8x1xf32> to vector<1x8x8xf32>
    %39 = arith.divf %35, %38 : vector<1x8x8xf32>
    %c0_22 = arith.constant 0 : index
    %c0_23 = arith.constant 0 : index
    %c0_24 = arith.constant 0 : index
    %c0_25 = arith.constant 0 : index
    %40 = vector.load %arg13[%c0_22, %c0_23, %c0_24, %c0_25] : memref<1x4x8x8xf32, #tpu.memory_space<vmem>>, vector<1x1x8x8xf32>
    %41 = vector.shape_cast %40 : vector<1x1x8x8xf32> to vector<1x8x8xf32>
    %42 = vector.shape_cast %39 : vector<1x8x8xf32> to vector<1x1x8x8xf32>
    tpu.vector_store %arg13[%c0_22, %c0_23, %c0_24, %c0_25], %42 {strides = array<i32>} : memref<1x4x8x8xf32, #tpu.memory_space<vmem>>, vector<1x1x8x8xf32>,
    %43 = arith.truncf %39 : vector<1x8x8xf32> to vector<1x8x8xbf16>
    "tpu.trace_start"() <{level = 10 : i32, message = "tcs,tsd->tcd"}> : () -> ()
    %cst_26 = arith.constant dense<0.000000e+00> : vector<1x8x8xf32>
    %44 = tpu.matmul %43, %29, %cst_26 {dimension_numbers = #tpu.dot_dimension_numbers<[2], [1], [1], [2], [0, 0, 0, 1, 1, 2], [0], [0]>} : vector<1x8x8xbf16>, vector<1x8x8xbf16>, vector<1x8x8xf32> -> vector<1x8x8xf32>
    "tpu.trace_stop"() : () -> ()
    %45 = vector.shape_cast %44 : vector<1x8x8xf32> to vector<8x8xf32>
    %c0_27 = arith.constant 0 : index
    %c0_28 = arith.constant 0 : index
    %46 = vector.load %arg14[%c0_27, %c0_28] : memref<8x32xf32, #tpu.memory_space<vmem>>, vector<8x8xf32>
    tpu.vector_store %arg14[%c0_27, %c0_28], %45 {strides = array<i32>} : memref<8x32xf32, #tpu.memory_space<vmem>>, vector<8x8xf32>,
    %47 = vector.extract_strided_slice %11 {offsets = [0, 8], sizes = [8, 8], strides = [1, 1]} : vector<8x32xbf16> to vector<8x8xbf16>
    %48 = vector.shape_cast %47 : vector<8x8xbf16> to vector<1x8x8xbf16>
    %49 = vector.extract_strided_slice %17 {offsets = [0, 8], sizes = [8, 8], strides = [1, 1]} : vector<8x32xbf16> to vector<8x8xbf16>
    %50 = vector.shape_cast %49 : vector<8x8xbf16> to vector<1x8x8xbf16>
    %51 = vector.extract_strided_slice %23 {offsets = [0, 8], sizes = [8, 8], strides = [1, 1]} : vector<8x32xbf16> to vector<8x8xbf16>
    %52 = vector.shape_cast %51 : vector<8x8xbf16> to vector<1x8x8xbf16>
    "tpu.trace_start"() <{level = 10 : i32, message = "tce,tse->tcs"}> : () -> ()
    %cst_29 = arith.constant dense<0.000000e+00> : vector<1x8x8xf32>
    %53 = tpu.matmul %48, %50, %cst_29 {dimension_numbers = #tpu.dot_dimension_numbers<[2], [2], [1], [1], [0, 0, 0, 1, 1, 1], [0], [0]>} : vector<1x8x8xbf16>, vector<1x8x8xbf16>, vector<1x8x8xf32> -> vector<1x8x8xf32>
    "tpu.trace_stop"() : () -> ()
    %cst_30 = arith.constant dense<0xFF800000> : vector<1x8xf32>
    %54 = vector.multi_reduction <maximumf>, %53, %cst_30 [2] : vector<1x8x8xf32> to vector<1x8xf32>
    %55 = vector.shape_cast %54 : vector<1x8xf32> to vector<1x8x1xf32>
    %56 = vector.broadcast %55 : vector<1x8x1xf32> to vector<1x8x8xf32>
    %57 = arith.subf %53, %56 : vector<1x8x8xf32>
    %58 = math.exp %57 : vector<1x8x8xf32>
    %cst_31 = arith.constant dense<0.000000e+00> : vector<1x8xf32>
    %59 = vector.multi_reduction <add>, %58, %cst_31 [2] : vector<1x8x8xf32> to vector<1x8xf32>
    %60 = vector.shape_cast %59 : vector<1x8xf32> to vector<1x8x1xf32>
    %61 = vector.broadcast %60 : vector<1x8x1xf32> to vector<1x8x8xf32>
    %62 = arith.divf %58, %61 : vector<1x8x8xf32>
    %c0_32 = arith.constant 0 : index
    %c1 = arith.constant 1 : index
    %c0_33 = arith.constant 0 : index
    %c0_34 = arith.constant 0 : index
    %63 = vector.load %arg13[%c0_32, %c1, %c0_33, %c0_34] : memref<1x4x8x8xf32, #tpu.memory_space<vmem>>, vector<1x1x8x8xf32>
    %64 = vector.shape_cast %63 : vector<1x1x8x8xf32> to vector<1x8x8xf32>
    %65 = vector.shape_cast %62 : vector<1x8x8xf32> to vector<1x1x8x8xf32>
    tpu.vector_store %arg13[%c0_32, %c1, %c0_33, %c0_34], %65 {strides = array<i32>} : memref<1x4x8x8xf32, #tpu.memory_space<vmem>>, vector<1x1x8x8xf32>,
    %66 = arith.truncf %62 : vector<1x8x8xf32> to vector<1x8x8xbf16>
    "tpu.trace_start"() <{level = 10 : i32, message = "tcs,tsd->tcd"}> : () -> ()
    %cst_35 = arith.constant dense<0.000000e+00> : vector<1x8x8xf32>
    %67 = tpu.matmul %66, %52, %cst_35 {dimension_numbers = #tpu.dot_dimension_numbers<[2], [1], [1], [2], [0, 0, 0, 1, 1, 2], [0], [0]>} : vector<1x8x8xbf16>, vector<1x8x8xbf16>, vector<1x8x8xf32> -> vector<1x8x8xf32>
    "tpu.trace_stop"() : () -> ()
    %68 = vector.shape_cast %67 : vector<1x8x8xf32> to vector<8x8xf32>
    %c0_36 = arith.constant 0 : index
    %c8 = arith.constant 8 : index
    %69 = vector.load %arg14[%c0_36, %c8] : memref<8x32xf32, #tpu.memory_space<vmem>>, vector<8x8xf32>
    tpu.vector_store %arg14[%c0_36, %c8], %68 {strides = array<i32>} : memref<8x32xf32, #tpu.memory_space<vmem>>, vector<8x8xf32>,
    %70 = vector.extract_strided_slice %11 {offsets = [0, 16], sizes = [8, 8], strides = [1, 1]} : vector<8x32xbf16> to vector<8x8xbf16>
    %71 = vector.shape_cast %70 : vector<8x8xbf16> to vector<1x8x8xbf16>
    %72 = vector.extract_strided_slice %17 {offsets = [0, 16], sizes = [8, 8], strides = [1, 1]} : vector<8x32xbf16> to vector<8x8xbf16>
    %73 = vector.shape_cast %72 : vector<8x8xbf16> to vector<1x8x8xbf16>
    %74 = vector.extract_strided_slice %23 {offsets = [0, 16], sizes = [8, 8], strides = [1, 1]} : vector<8x32xbf16> to vector<8x8xbf16>
    %75 = vector.shape_cast %74 : vector<8x8xbf16> to vector<1x8x8xbf16>
    "tpu.trace_start"() <{level = 10 : i32, message = "tce,tse->tcs"}> : () -> ()
    %cst_37 = arith.constant dense<0.000000e+00> : vector<1x8x8xf32>
    %76 = tpu.matmul %71, %73, %cst_37 {dimension_numbers = #tpu.dot_dimension_numbers<[2], [2], [1], [1], [0, 0, 0, 1, 1, 1], [0], [0]>} : vector<1x8x8xbf16>, vector<1x8x8xbf16>, vector<1x8x8xf32> -> vector<1x8x8xf32>
    "tpu.trace_stop"() : () -> ()
    %cst_38 = arith.constant dense<0xFF800000> : vector<1x8xf32>
    %77 = vector.multi_reduction <maximumf>, %76, %cst_38 [2] : vector<1x8x8xf32> to vector<1x8xf32>
    %78 = vector.shape_cast %77 : vector<1x8xf32> to vector<1x8x1xf32>
    %79 = vector.broadcast %78 : vector<1x8x1xf32> to vector<1x8x8xf32>
    %80 = arith.subf %76, %79 : vector<1x8x8xf32>
    %81 = math.exp %80 : vector<1x8x8xf32>
    %cst_39 = arith.constant dense<0.000000e+00> : vector<1x8xf32>
    %82 = vector.multi_reduction <add>, %81, %cst_39 [2] : vector<1x8x8xf32> to vector<1x8xf32>
    %83 = vector.shape_cast %82 : vector<1x8xf32> to vector<1x8x1xf32>
    %84 = vector.broadcast %83 : vector<1x8x1xf32> to vector<1x8x8xf32>
    %85 = arith.divf %81, %84 : vector<1x8x8xf32>
    %c0_40 = arith.constant 0 : index
    %c2 = arith.constant 2 : index
    %c0_41 = arith.constant 0 : index
    %c0_42 = arith.constant 0 : index
    %86 = vector.load %arg13[%c0_40, %c2, %c0_41, %c0_42] : memref<1x4x8x8xf32, #tpu.memory_space<vmem>>, vector<1x1x8x8xf32>
    %87 = vector.shape_cast %86 : vector<1x1x8x8xf32> to vector<1x8x8xf32>
    %88 = vector.shape_cast %85 : vector<1x8x8xf32> to vector<1x1x8x8xf32>
    tpu.vector_store %arg13[%c0_40, %c2, %c0_41, %c0_42], %88 {strides = array<i32>} : memref<1x4x8x8xf32, #tpu.memory_space<vmem>>, vector<1x1x8x8xf32>,
    %89 = arith.truncf %85 : vector<1x8x8xf32> to vector<1x8x8xbf16>
    "tpu.trace_start"() <{level = 10 : i32, message = "tcs,tsd->tcd"}> : () -> ()
    %cst_43 = arith.constant dense<0.000000e+00> : vector<1x8x8xf32>
    %90 = tpu.matmul %89, %75, %cst_43 {dimension_numbers = #tpu.dot_dimension_numbers<[2], [1], [1], [2], [0, 0, 0, 1, 1, 2], [0], [0]>} : vector<1x8x8xbf16>, vector<1x8x8xbf16>, vector<1x8x8xf32> -> vector<1x8x8xf32>
    "tpu.trace_stop"() : () -> ()
    %91 = vector.shape_cast %90 : vector<1x8x8xf32> to vector<8x8xf32>
    %c0_44 = arith.constant 0 : index
    %c16 = arith.constant 16 : index
    %92 = vector.load %arg14[%c0_44, %c16] : memref<8x32xf32, #tpu.memory_space<vmem>>, vector<8x8xf32>
    tpu.vector_store %arg14[%c0_44, %c16], %91 {strides = array<i32>} : memref<8x32xf32, #tpu.memory_space<vmem>>, vector<8x8xf32>,
    %93 = vector.extract_strided_slice %11 {offsets = [0, 24], sizes = [8, 8], strides = [1, 1]} : vector<8x32xbf16> to vector<8x8xbf16>
    %94 = vector.shape_cast %93 : vector<8x8xbf16> to vector<1x8x8xbf16>
    %95 = vector.extract_strided_slice %17 {offsets = [0, 24], sizes = [8, 8], strides = [1, 1]} : vector<8x32xbf16> to vector<8x8xbf16>
    %96 = vector.shape_cast %95 : vector<8x8xbf16> to vector<1x8x8xbf16>
    %97 = vector.extract_strided_slice %23 {offsets = [0, 24], sizes = [8, 8], strides = [1, 1]} : vector<8x32xbf16> to vector<8x8xbf16>
    %98 = vector.shape_cast %97 : vector<8x8xbf16> to vector<1x8x8xbf16>
    "tpu.trace_start"() <{level = 10 : i32, message = "tce,tse->tcs"}> : () -> ()
    %cst_45 = arith.constant dense<0.000000e+00> : vector<1x8x8xf32>
    %99 = tpu.matmul %94, %96, %cst_45 {dimension_numbers = #tpu.dot_dimension_numbers<[2], [2], [1], [1], [0, 0, 0, 1, 1, 1], [0], [0]>} : vector<1x8x8xbf16>, vector<1x8x8xbf16>, vector<1x8x8xf32> -> vector<1x8x8xf32>
    "tpu.trace_stop"() : () -> ()
    %cst_46 = arith.constant dense<0xFF800000> : vector<1x8xf32>
    %100 = vector.multi_reduction <maximumf>, %99, %cst_46 [2] : vector<1x8x8xf32> to vector<1x8xf32>
    %101 = vector.shape_cast %100 : vector<1x8xf32> to vector<1x8x1xf32>
    %102 = vector.broadcast %101 : vector<1x8x1xf32> to vector<1x8x8xf32>
    %103 = arith.subf %99, %102 : vector<1x8x8xf32>
    %104 = math.exp %103 : vector<1x8x8xf32>
    %cst_47 = arith.constant dense<0.000000e+00> : vector<1x8xf32>
    %105 = vector.multi_reduction <add>, %104, %cst_47 [2] : vector<1x8x8xf32> to vector<1x8xf32>
    %106 = vector.shape_cast %105 : vector<1x8xf32> to vector<1x8x1xf32>
    %107 = vector.broadcast %106 : vector<1x8x1xf32> to vector<1x8x8xf32>
    %108 = arith.divf %104, %107 : vector<1x8x8xf32>
    %c0_48 = arith.constant 0 : index
    %c3 = arith.constant 3 : index
    %c0_49 = arith.constant 0 : index
    %c0_50 = arith.constant 0 : index
    %109 = vector.load %arg13[%c0_48, %c3, %c0_49, %c0_50] : memref<1x4x8x8xf32, #tpu.memory_space<vmem>>, vector<1x1x8x8xf32>
    %110 = vector.shape_cast %109 : vector<1x1x8x8xf32> to vector<1x8x8xf32>
    %111 = vector.shape_cast %108 : vector<1x8x8xf32> to vector<1x1x8x8xf32>
    tpu.vector_store %arg13[%c0_48, %c3, %c0_49, %c0_50], %111 {strides = array<i32>} : memref<1x4x8x8xf32, #tpu.memory_space<vmem>>, vector<1x1x8x8xf32>,
    %112 = arith.truncf %108 : vector<1x8x8xf32> to vector<1x8x8xbf16>
    "tpu.trace_start"() <{level = 10 : i32, message = "tcs,tsd->tcd"}> : () -> ()
    %cst_51 = arith.constant dense<0.000000e+00> : vector<1x8x8xf32>
    %113 = tpu.matmul %112, %98, %cst_51 {dimension_numbers = #tpu.dot_dimension_numbers<[2], [1], [1], [2], [0, 0, 0, 1, 1, 2], [0], [0]>} : vector<1x8x8xbf16>, vector<1x8x8xbf16>, vector<1x8x8xf32> -> vector<1x8x8xf32>
    "tpu.trace_stop"() : () -> ()
    %114 = vector.shape_cast %113 : vector<1x8x8xf32> to vector<8x8xf32>
    %c0_52 = arith.constant 0 : index
    %c24 = arith.constant 24 : index
    %115 = vector.load %arg14[%c0_52, %c24] : memref<8x32xf32, #tpu.memory_space<vmem>>, vector<8x8xf32>
    tpu.vector_store %arg14[%c0_52, %c24], %114 {strides = array<i32>} : memref<8x32xf32, #tpu.memory_space<vmem>>, vector<8x8xf32>,
    %c0_53 = arith.constant 0 : index
    %c0_54 = arith.constant 0 : index
    %116 = vector.load %arg14[%c0_53, %c0_54] : memref<8x32xf32, #tpu.memory_space<vmem>>, vector<8x32xf32>
    %117 = arith.truncf %116 : vector<8x32xf32> to vector<8x32xbf16>
    %c0_55 = arith.constant 0 : index
    %c0_56 = arith.constant 0 : index
    %118 = vector.load %arg10[%c0_55, %c0_56] : memref<32x32xbf16, #tpu.memory_space<vmem>>, vector<32x32xbf16>
    %cst_57 = arith.constant dense<0.000000e+00> : vector<8x32xf32>
    %119 = tpu.matmul %117, %118, %cst_57 {dimension_numbers = #tpu.dot_dimension_numbers<[1], [0], [0], [1], [0, 0, 1, 1], [], []>} : vector<8x32xbf16>, vector<32x32xbf16>, vector<8x32xf32> -> vector<8x32xf32>
    %c0_58 = arith.constant 0 : index
    %c0_59 = arith.constant 0 : index
    %120 = vector.load %arg11[%c0_58, %c0_59] : memref<1x32xf32, #tpu.memory_space<vmem>>, vector<1x32xf32>
    %121 = vector.broadcast %120 : vector<1x32xf32> to vector<8x32xf32>
    %122 = arith.addf %119, %121 : vector<8x32xf32>
    %c0_60 = arith.constant 0 : index
    %c0_61 = arith.constant 0 : index
    %123 = vector.load %arg12[%c0_60, %c0_61] : memref<8x32xf32, #tpu.memory_space<vmem>>, vector<8x32xf32>
    tpu.vector_store %arg12[%c0_60, %c0_61], %122 {strides = array<i32>} : memref<8x32xf32, #tpu.memory_space<vmem>>, vector<8x32xf32>,
    return
  }
  func.func @transform_0(%arg0: i32) -> (i32, i32) {
    %c0_i32 = arith.constant 0 : i32
    %c0_i32_0 = arith.constant 0 : i32
    return %arg0, %c0_i32 : i32, i32
  }
  func.func @transform_1(%arg0: i32) -> (i32, i32) {
    %c0_i32 = arith.constant 0 : i32
    %c0_i32_0 = arith.constant 0 : i32
    return %arg0, %c0_i32 : i32, i32
  }
  func.func @transform_2(%arg0: i32) -> (i32, i32) {
    %c0_i32 = arith.constant 0 : i32
    %c0_i32_0 = arith.constant 0 : i32
    return %arg0, %c0_i32 : i32, i32
  }
  func.func @transform_3(%arg0: i32) -> (i32, i32) {
    %c0_i32 = arith.constant 0 : i32
    %c0_i32_0 = arith.constant 0 : i32
    %c0_i32_1 = arith.constant 0 : i32
    return %c0_i32, %c0_i32_0 : i32, i32
  }
  func.func @transform_4(%arg0: i32) -> (i32, i32) {
    %c0_i32 = arith.constant 0 : i32
    %c0_i32_0 = arith.constant 0 : i32
    %c0_i32_1 = arith.constant 0 : i32
    return %c0_i32, %c0_i32_0 : i32, i32
  }
  func.func @transform_5(%arg0: i32) -> (i32, i32) {
    %c0_i32 = arith.constant 0 : i32
    %c0_i32_0 = arith.constant 0 : i32
    %c0_i32_1 = arith.constant 0 : i32
    return %c0_i32, %c0_i32_0 : i32, i32
  }
  func.func @transform_6(%arg0: i32) -> (i32, i32) {
    %c0_i32 = arith.constant 0 : i32
    %c0_i32_0 = arith.constant 0 : i32
    %c0_i32_1 = arith.constant 0 : i32
    return %c0_i32, %c0_i32_0 : i32, i32
  }
  func.func @transform_7(%arg0: i32) -> (i32, i32) {
    %c0_i32 = arith.constant 0 : i32
    %c0_i32_0 = arith.constant 0 : i32
    %c0_i32_1 = arith.constant 0 : i32
    return %c0_i32, %c0_i32_0 : i32, i32
  }
  func.func @transform_8(%arg0: i32) -> (i32, i32) {
    %c0_i32 = arith.constant 0 : i32
    %c0_i32_0 = arith.constant 0 : i32
    %c0_i32_1 = arith.constant 0 : i32
    return %c0_i32, %c0_i32_0 : i32, i32
  }
  func.func @transform_9(%arg0: i32) -> (i32, i32) {
    %c0_i32 = arith.constant 0 : i32
    %c0_i32_0 = arith.constant 0 : i32
    %c0_i32_1 = arith.constant 0 : i32
    return %c0_i32, %c0_i32_0 : i32, i32
  }
  func.func @transform_10(%arg0: i32) -> (i32, i32) {
    %c0_i32 = arith.constant 0 : i32
    %c0_i32_0 = arith.constant 0 : i32
    %c0_i32_1 = arith.constant 0 : i32
    return %c0_i32, %c0_i32_0 : i32, i32
  }
  func.func @transform_11(%arg0: i32) -> (i32, i32) {
    %c0_i32 = arith.constant 0 : i32
    %c0_i32_0 = arith.constant 0 : i32
    return %arg0, %c0_i32 : i32, i32
  }
  func.func @transform_12(%arg0: i32) -> (i32, i32, i32, i32) {
    %c0_i32 = arith.constant 0 : i32
    %c0_i32_0 = arith.constant 0 : i32
    %c0_i32_1 = arith.constant 0 : i32
    %c0_i32_2 = arith.constant 0 : i32
    return %arg0, %c0_i32, %c0_i32_0, %c0_i32_1 : i32, i32, i32, i32
  }
}

</mosaic_0001>

<llo_original>
// kernel: tpu_custom_call.1
$region0: #{tpu_custom_call.1}
  #allocation0 [shape = 'u32[]', space=smem, size = 0x4, offset = 0x4, fixed_abs, tag = 'smem constant byte address 0x4 - core index']
  #allocation1 [shape = 'u32[144,128]{1,0:T(1,128)}', space=vmem, size = 0x12000, scoped, tag = 'internal scratch']
  #allocation2 [shape = 'f32[8,32]{1,0:T(8,128)}', space=vmem, size = 0x1000, scoped, tag = 'scratch operand']
  %s0 = inlined_call_operand.hbm [shape: f32[32,32], index: 0, kind: input, shape index: {}]
  %s1 = inlined_call_operand.hbm [shape: f32[32,32], index: 1, kind: input, shape index: {}]
  %s2 = inlined_call_operand.hbm [shape: f32[32,32], index: 2, kind: input, shape index: {}]
  %s3 = inlined_call_operand.hbm [shape: bf16[32,32], index: 3, kind: input, shape index: {}]
  %s4 = inlined_call_operand.hbm [shape: f32[1,32], index: 4, kind: input, shape index: {}]
  %s5 = inlined_call_operand.hbm [shape: bf16[32,32], index: 5, kind: input, shape index: {}]
  %s6 = inlined_call_operand.hbm [shape: f32[1,32], index: 6, kind: input, shape index: {}]
  %s7 = inlined_call_operand.hbm [shape: bf16[32,32], index: 7, kind: input, shape index: {}]
  %s8 = inlined_call_operand.hbm [shape: f32[1,32], index: 8, kind: input, shape index: {}]
  %s9 = inlined_call_operand.vmem [shape: bf16[32,32], index: 9, kind: input, shape index: {}]
  %s10 = inlined_call_operand.vmem [shape: f32[1,32], index: 10, kind: input, shape index: {}]
  %s11 = inlined_call_operand.hbm [shape: f32[32,32], index: 11, kind: output, shape index: {0}]
  %s12 = inlined_call_operand.hbm [shape: f32[4,4,8,8], index: 12, kind: output, shape index: {1}]
  %13 = xla_tuple %s11, %s12
  %s14 = sld [smem:[#allocation0]]
  $region121: #{tpu_custom_call.1} parent=0
    _
  %s16 = ssub.s32 1, %s14
  %s17 = scalar_select 0, %s16, %s14
  $region1: #{tpu_custom_call.1} parent=0
    #allocation3 [shape = 'u8[8192]{0}', space=vmem, size = 0x2000, scoped, tag = 'input window, operand 0']
    #allocation4 [shape = 's32[2]{0}', space=sflag, size = 0x8, scoped, tag = 'scoped memory for tpu_custom_call.1']
    #allocation5 [shape = 's32[2]{0}', space=sflag, size = 0x8, scoped, tag = 'scoped memory for tpu_custom_call.1']
    #allocation6 [shape = 'u8[8192]{0}', space=vmem, size = 0x2000, scoped, tag = 'input window, operand 1']
    #allocation7 [shape = 's32[2]{0}', space=sflag, size = 0x8, scoped, tag = 'scoped memory for tpu_custom_call.1']
    #allocation8 [shape = 'u8[8192]{0}', space=vmem, size = 0x2000, scoped, tag = 'input window, operand 2']
    #allocation9 [shape = 'u8[8192]{0}', space=vmem, size = 0x2000, scoped, tag = 'input window, operand 3, single buffered']
    #allocation10 [shape = 's32[1]{0}', space=sflag, size = 0x4, scoped, tag = 'scoped memory for tpu_custom_call.1']
    #allocation11 [shape = 'u8[512]{0}', space=vmem, size = 0x400, scoped, tag = 'input window, operand 4, single buffered']
    #allocation12 [shape = 'u8[8192]{0}', space=vmem, size = 0x2000, scoped, tag = 'input window, operand 5, single buffered']
    #allocation13 [shape = 's32[1]{0}', space=sflag, size = 0x4, scoped, tag = 'scoped memory for tpu_custom_call.1']
    #allocation14 [shape = 'u8[512]{0}', space=vmem, size = 0x400, scoped, tag = 'input window, operand 6, single buffered']
    #allocation15 [shape = 'u8[8192]{0}', space=vmem, size = 0x2000, scoped, tag = 'input window, operand 7, single buffered']
    #allocation16 [shape = 's32[1]{0}', space=sflag, size = 0x4, scoped, tag = 'scoped memory for tpu_custom_call.1']
    #allocation17 [shape = 'u8[512]{0}', space=vmem, size = 0x400, scoped, tag = 'input window, operand 8, single buffered']
    #allocation18 [shape = 'u8[8192]{0}', space=vmem, size = 0x2000, scoped, tag = 'output window, operand 0']
    #allocation19 [shape = 'u8[32768]{0}', space=vmem, size = 0x8000, scoped, tag = 'output window, operand 1']
    #allocation20 [shape = 's32[2]{0}', space=sflag, size = 0x8, scoped, tag = 'scoped memory for tpu_custom_call.1']
    %18 = vsyncpa [#allocation4], 0
    %s19 = scalar_lea.sflag [#allocation4], 1
    %20 = vsyncpa %s19, 0
    %21 = vsyncpa [#allocation7], 0
    %s22 = scalar_lea.sflag [#allocation7], 1
    %23 = vsyncpa %s22, 0
    %24 = vsyncpa [#allocation10], 0
    %25 = vsyncpa [#allocation13], 0
    %26 = vsyncpa [#allocation16], 0
    %27 = vsyncpa [#allocation5], 0
    %s28 = scalar_lea.sflag [#allocation5], 1
    %29 = vsyncpa %s28, 0
    %30 = vsyncpa [#allocation20], 0
    %s31 = scalar_lea.sflag [#allocation20], 1
    %32 = vsyncpa %s31, 0
    loop: start=0, step=1, limit=6
    $region2: #{tpu_custom_call.1} parent=1 // loop_pre_header
      _
    $region3: #{tpu_custom_call.1} parent=1 // loop_header
      %s34 = sphi 0, %s38
      %p35 = scmp.ge.s32.totalorder %s34, 6
      %s44 = sphi 0, %s46
      %s47 = sphi 0, %s44
      %s48 = sphi 0, %s47
      %s64 = sphi 0, %s48
      %s70 = sphi 0, %s72
      %s73 = sphi 0, %s70
      %s74 = sphi 0, %s73
      %s90 = sphi 0, %s74
      %s96 = sphi 0, %s98
      %s99 = sphi 0, %s96
      %s100 = sphi 0, %s99
      %s116 = sphi 0, %s100
      %s120 = sphi 0, %s120
      %s122 = sphi 0, %s120
      %s123 = sphi 0, %s122
      %s137 = sphi 0, %s123
      %s141 = sphi 0, %s141
      %s143 = sphi 0, %s141
      %s144 = sphi 0, %s143
      %s158 = sphi 0, %s144
      %s162 = sphi 0, %s162
      %s164 = sphi 0, %s162
      %s165 = sphi 0, %s164
      %s179 = sphi 0, %s165
      %s183 = sphi 0, %s183
      %s185 = sphi 0, %s183
      %s186 = sphi 0, %s185
      %s200 = sphi 0, %s186
      %s204 = sphi 0, %s204
      %s206 = sphi 0, %s204
      %s207 = sphi 0, %s206
      %s221 = sphi 0, %s207
      %s225 = sphi 0, %s225
      %s227 = sphi 0, %s225
      %s228 = sphi 0, %s227
      %s242 = sphi 0, %s228
      %s246 = sphi 0, %s246
      %s248 = sphi 0, %s246
      %s249 = sphi 0, %s248
      %s263 = sphi 0, %s249
      %s267 = sphi 0, %s267
      %s269 = sphi 0, %s267
      %s270 = sphi 0, %s269
      %s284 = sphi 0, %s270
      %s290 = sphi 0, %s292
      %s293 = sphi 0, %s290
      %s294 = sphi 0, %s293
      %s310 = sphi 0, %s294
      %s316 = sphi 0, %s318
      %s319 = sphi 0, %s316
      %s320 = sphi 0, %s319
      %s336 = sphi 0, %s320
    $region4: #{tpu_custom_call.1} parent=1 // loop_header_branch
      %37 = sbr.rel (%p35) target = $region8
    $region5: #{tpu_custom_call.1} parent=1 // loop_body
      %s39 = ssub.s32 %s34, 1
      %s40 = ssub.s32 %s34, 2
      %s41 = sadd.s32 %s34, 1
      %s42 = ssub.s32 %s34, %s41
      %p43 = scmp.eq.s32.totalorder %s42, 0
      %s45 = sadd.s32 %s44, 1
      %s46 = scalar_select %p43, %s44, %s45
      %p49 = pneg %p43
      %p50 = scmp.eq.s32.totalorder %s34, 3
      %p51 = por %p49, %p50
      %p52 = scmp.ne.s32.totalorder %s44, %s47
      %p53 = scmp.eq.s32.totalorder %s34, 0
      %p54 = por %p52, %p53
      %p55 = scmp.ne.s32.totalorder %s44, %s47
      %p56 = scmp.eq.s32.totalorder %s39, 3
      %p57 = por %p55, %p56
      %p58 = scmp.ne.s32.totalorder %s47, %s48
      %p59 = scmp.eq.s32.totalorder %s39, 0
      %p60 = por %p58, %p59
      %p61 = scmp.ne.s32.totalorder %s47, %s48
      %p62 = scmp.eq.s32.totalorder %s40, 3
      %p63 = por %p61, %p62
      %p65 = scmp.ne.s32.totalorder %s48, %s64
      %p66 = scmp.eq.s32.totalorder %s40, 0
      %p67 = por %p65, %p66
      %s68 = ssub.s32 %s34, %s41
      %p69 = scmp.eq.s32.totalorder %s68, 0
      %s71 = sadd.s32 %s70, 1
      %s72 = scalar_select %p69, %s70, %s71
      %p75 = pneg %p69
      %p76 = scmp.eq.s32.totalorder %s34, 3
      %p77 = por %p75, %p76
      %p78 = scmp.ne.s32.totalorder %s70, %s73
      %p79 = scmp.eq.s32.totalorder %s34, 0
      %p80 = por %p78, %p79
      %p81 = scmp.ne.s32.totalorder %s70, %s73
      %p82 = scmp.eq.s32.totalorder %s39, 3
      %p83 = por %p81, %p82
      %p84 = scmp.ne.s32.totalorder %s73, %s74
      %p85 = scmp.eq.s32.totalorder %s39, 0
      %p86 = por %p84, %p85
      %p87 = scmp.ne.s32.totalorder %s73, %s74
      %p88 = scmp.eq.s32.totalorder %s40, 3
      %p89 = por %p87, %p88
      %p91 = scmp.ne.s32.totalorder %s74, %s90
      %p92 = scmp.eq.s32.totalorder %s40, 0
      %p93 = por %p91, %p92
      %s94 = ssub.s32 %s34, %s41
      %p95 = scmp.eq.s32.totalorder %s94, 0
      %s97 = sadd.s32 %s96, 1
      %s98 = scalar_select %p95, %s96, %s97
      %p101 = pneg %p95
      %p102 = scmp.eq.s32.totalorder %s34, 3
      %p103 = por %p101, %p102
      %p104 = scmp.ne.s32.totalorder %s96, %s99
      %p105 = scmp.eq.s32.totalorder %s34, 0
      %p106 = por %p104, %p105
      %p107 = scmp.ne.s32.totalorder %s96, %s99
      %p108 = scmp.eq.s32.totalorder %s39, 3
      %p109 = por %p107, %p108
      %p110 = scmp.ne.s32.totalorder %s99, %s100
      %p111 = scmp.eq.s32.totalorder %s39, 0
      %p112 = por %p110, %p111
      %p113 = scmp.ne.s32.totalorder %s99, %s100
      %p114 = scmp.eq.s32.totalorder %s40, 3
      %p115 = por %p113, %p114
      %p117 = scmp.ne.s32.totalorder %s100, %s116
      %p118 = scmp.eq.s32.totalorder %s40, 0
      %p119 = por %p117, %p118
      %s121 = sadd.s32 %s120, 1
      %p124 = scmp.eq.s32.totalorder %s34, 3
      %p125 = scmp.ne.s32.totalorder %s120, %s122
      %p126 = scmp.eq.s32.totalorder %s34, 0
      %p127 = por %p125, %p126
      %p128 = scmp.ne.s32.totalorder %s120, %s122
      %p129 = scmp.eq.s32.totalorder %s39, 3
      %p130 = por %p128, %p129
      %p131 = scmp.ne.s32.totalorder %s122, %s123
      %p132 = scmp.eq.s32.totalorder %s39, 0
      %p133 = por %p131, %p132
      %p134 = scmp.ne.s32.totalorder %s122, %s123
      %p135 = scmp.eq.s32.totalorder %s40, 3
      %p136 = por %p134, %p135
      %p138 = scmp.ne.s32.totalorder %s123, %s137
      %p139 = scmp.eq.s32.totalorder %s40, 0
      %p140 = por %p138, %p139
      %s142 = sadd.s32 %s141, 1
      %p145 = scmp.eq.s32.totalorder %s34, 3
      %p146 = scmp.ne.s32.totalorder %s141, %s143
      %p147 = scmp.eq.s32.totalorder %s34, 0
      %p148 = por %p146, %p147
      %p149 = scmp.ne.s32.totalorder %s141, %s143
      %p150 = scmp.eq.s32.totalorder %s39, 3
      %p151 = por %p149, %p150
      %p152 = scmp.ne.s32.totalorder %s143, %s144
      %p153 = scmp.eq.s32.totalorder %s39, 0
      %p154 = por %p152, %p153
      %p155 = scmp.ne.s32.totalorder %s143, %s144
      %p156 = scmp.eq.s32.totalorder %s40, 3
      %p157 = por %p155, %p156
      %p159 = scmp.ne.s32.totalorder %s144, %s158
      %p160 = scmp.eq.s32.totalorder %s40, 0
      %p161 = por %p159, %p160
      %s163 = sadd.s32 %s162, 1
      %p166 = scmp.eq.s32.totalorder %s34, 3
      %p167 = scmp.ne.s32.totalorder %s162, %s164
      %p168 = scmp.eq.s32.totalorder %s34, 0
      %p169 = por %p167, %p168
      %p170 = scmp.ne.s32.totalorder %s162, %s164
      %p171 = scmp.eq.s32.totalorder %s39, 3
      %p172 = por %p170, %p171
      %p173 = scmp.ne.s32.totalorder %s164, %s165
      %p174 = scmp.eq.s32.totalorder %s39, 0
      %p175 = por %p173, %p174
      %p176 = scmp.ne.s32.totalorder %s164, %s165
      %p177 = scmp.eq.s32.totalorder %s40, 3
      %p178 = por %p176, %p177
      %p180 = scmp.ne.s32.totalorder %s165, %s179
      %p181 = scmp.eq.s32.totalorder %s40, 0
      %p182 = por %p180, %p181
      %s184 = sadd.s32 %s183, 1
      %p187 = scmp.eq.s32.totalorder %s34, 3
      %p188 = scmp.ne.s32.totalorder %s183, %s185
      %p189 = scmp.eq.s32.totalorder %s34, 0
      %p190 = por %p188, %p189
      %p191 = scmp.ne.s32.totalorder %s183, %s185
      %p192 = scmp.eq.s32.totalorder %s39, 3
      %p193 = por %p191, %p192
      %p194 = scmp.ne.s32.totalorder %s185, %s186
      %p195 = scmp.eq.s32.totalorder %s39, 0
      %p196 = por %p194, %p195
      %p197 = scmp.ne.s32.totalorder %s185, %s186
      %p198 = scmp.eq.s32.totalorder %s40, 3
      %p199 = por %p197, %p198
      %p201 = scmp.ne.s32.totalorder %s186, %s200
      %p202 = scmp.eq.s32.totalorder %s40, 0
      %p203 = por %p201, %p202
      %s205 = sadd.s32 %s204, 1
      %p208 = scmp.eq.s32.totalorder %s34, 3
      %p209 = scmp.ne.s32.totalorder %s204, %s206
      %p210 = scmp.eq.s32.totalorder %s34, 0
      %p211 = por %p209, %p210
      %p212 = scmp.ne.s32.totalorder %s204, %s206
      %p213 = scmp.eq.s32.totalorder %s39, 3
      %p214 = por %p212, %p213
      %p215 = scmp.ne.s32.totalorder %s206, %s207
      %p216 = scmp.eq.s32.totalorder %s39, 0
      %p217 = por %p215, %p216
      %p218 = scmp.ne.s32.totalorder %s206, %s207
      %p219 = scmp.eq.s32.totalorder %s40, 3
      %p220 = por %p218, %p219
      %p222 = scmp.ne.s32.totalorder %s207, %s221
      %p223 = scmp.eq.s32.totalorder %s40, 0
      %p224 = por %p222, %p223
      %s226 = sadd.s32 %s225, 1
      %p229 = scmp.eq.s32.totalorder %s34, 3
      %p230 = scmp.ne.s32.totalorder %s225, %s227
      %p231 = scmp.eq.s32.totalorder %s34, 0
      %p232 = por %p230, %p231
      %p233 = scmp.ne.s32.totalorder %s225, %s227
      %p234 = scmp.eq.s32.totalorder %s39, 3
      %p235 = por %p233, %p234
      %p236 = scmp.ne.s32.totalorder %s227, %s228
      %p237 = scmp.eq.s32.totalorder %s39, 0
      %p238 = por %p236, %p237
      %p239 = scmp.ne.s32.totalorder %s227, %s228
      %p240 = scmp.eq.s32.totalorder %s40, 3
      %p241 = por %p239, %p240
      %p243 = scmp.ne.s32.totalorder %s228, %s242
      %p244 = scmp.eq.s32.totalorder %s40, 0
      %p245 = por %p243, %p244
      %s247 = sadd.s32 %s246, 1
      %p250 = scmp.eq.s32.totalorder %s34, 3
      %p251 = scmp.ne.s32.totalorder %s246, %s248
      %p252 = scmp.eq.s32.totalorder %s34, 0
      %p253 = por %p251, %p252
      %p254 = scmp.ne.s32.totalorder %s246, %s248
      %p255 = scmp.eq.s32.totalorder %s39, 3
      %p256 = por %p254, %p255
      %p257 = scmp.ne.s32.totalorder %s248, %s249
      %p258 = scmp.eq.s32.totalorder %s39, 0
      %p259 = por %p257, %p258
      %p260 = scmp.ne.s32.totalorder %s248, %s249
      %p261 = scmp.eq.s32.totalorder %s40, 3
      %p262 = por %p260, %p261
      %p264 = scmp.ne.s32.totalorder %s249, %s263
      %p265 = scmp.eq.s32.totalorder %s40, 0
      %p266 = por %p264, %p265
      %s268 = sadd.s32 %s267, 1
      %p271 = scmp.eq.s32.totalorder %s34, 3
      %p272 = scmp.ne.s32.totalorder %s267, %s269
      %p273 = scmp.eq.s32.totalorder %s34, 0
      %p274 = por %p272, %p273
      %p275 = scmp.ne.s32.totalorder %s267, %s269
      %p276 = scmp.eq.s32.totalorder %s39, 3
      %p277 = por %p275, %p276
      %p278 = scmp.ne.s32.totalorder %s269, %s270
      %p279 = scmp.eq.s32.totalorder %s39, 0
      %p280 = por %p278, %p279
      %p281 = scmp.ne.s32.totalorder %s269, %s270
      %p282 = scmp.eq.s32.totalorder %s40, 3
      %p283 = por %p281, %p282
      %p285 = scmp.ne.s32.totalorder %s270, %s284
      %p286 = scmp.eq.s32.totalorder %s40, 0
      %p287 = por %p285, %p286
      %s288 = ssub.s32 %s34, %s41
      %p289 = scmp.eq.s32.totalorder %s288, 0
      %s291 = sadd.s32 %s290, 1
      %s292 = scalar_select %p289, %s290, %s291
      %p295 = pneg %p289
      %p296 = scmp.eq.s32.totalorder %s34, 3
      %p297 = por %p295, %p296
      %p298 = scmp.ne.s32.totalorder %s290, %s293
      %p299 = scmp.eq.s32.totalorder %s34, 0
      %p300 = por %p298, %p299
      %p301 = scmp.ne.s32.totalorder %s290, %s293
      %p302 = scmp.eq.s32.totalorder %s39, 3
      %p303 = por %p301, %p302
      %p304 = scmp.ne.s32.totalorder %s293, %s294
      %p305 = scmp.eq.s32.totalorder %s39, 0
      %p306 = por %p304, %p305
      %p307 = scmp.ne.s32.totalorder %s293, %s294
      %p308 = scmp.eq.s32.totalorder %s40, 3
      %p309 = por %p307, %p308
      %p311 = scmp.ne.s32.totalorder %s294, %s310
      %p312 = scmp.eq.s32.totalorder %s40, 0
      %p313 = por %p311, %p312
      %s314 = ssub.s32 %s34, %s41
      %p315 = scmp.eq.s32.totalorder %s314, 0
      %s317 = sadd.s32 %s316, 1
      %s318 = scalar_select %p315, %s316, %s317
      %p321 = pneg %p315
      %p322 = scmp.eq.s32.totalorder %s34, 3
      %p323 = por %p321, %p322
      %p324 = scmp.ne.s32.totalorder %s316, %s319
      %p325 = scmp.eq.s32.totalorder %s34, 0
      %p326 = por %p324, %p325
      %p327 = scmp.ne.s32.totalorder %s316, %s319
      %p328 = scmp.eq.s32.totalorder %s39, 3
      %p329 = por %p327, %p328
      %p330 = scmp.ne.s32.totalorder %s319, %s320
      %p331 = scmp.eq.s32.totalorder %s39, 0
      %p332 = por %p330, %p331
      %p333 = scmp.ne.s32.totalorder %s319, %s320
      %p334 = scmp.eq.s32.totalorder %s40, 3
      %p335 = por %p333, %p334
      %p337 = scmp.ne.s32.totalorder %s320, %s336
      %p338 = scmp.eq.s32.totalorder %s40, 0
      %p339 = por %p337, %p338
      %p340 = scmp.le.s32.totalorder 1, %s34
      %p341 = scmp.lt.s32.totalorder %s34, 5
      %p342 = pnand %p340, %p341
      %p343 = pneg %p342
      // Predicated region
      $region9: #{tpu_custom_call.1} parent=5 // pred_check
        _
      $region10: #{tpu_custom_call.1} parent=5 // pred_check_branch
        %345 = sbr.rel (%p342) target = $region12
      $region11: #{tpu_custom_call.1} parent=5 // pred_region
        %s346 = ssub.s32 %s34, 1
        // Predicated region
        $region13: #{tpu_custom_call.1} parent=11 // pred_check
          %p347 = pneg %p133
        $region14: #{tpu_custom_call.1} parent=11 // pred_check_branch
          %349 = sbr.rel (%p347) target = $region16
        $region15: #{tpu_custom_call.1} parent=11 // pred_region
          %s351 = ssub.s32 256, 256
          %352 = vsyncadd [#allocation10], %s351
          %s353 = sshll.u32 [#allocation9], 4
          %s354 = int_to_ptr.vmem [resolvable:$true] %s353
          %359 = dma.hbm_to_vmem [thread:$0]  %s3, 256, %s354, [#allocation10], 64, 64, 4
        $region16: #{tpu_custom_call.1} parent=11 // pred_fallthru
          _
        // Predicated region
        $region17: #{tpu_custom_call.1} parent=11 // pred_check
          %p360 = pneg %p154
        $region18: #{tpu_custom_call.1} parent=11 // pred_check_branch
          %362 = sbr.rel (%p360) target = $region20
        $region19: #{tpu_custom_call.1} parent=11 // pred_region
          %s364 = ssub.s32 16, 16
          %365 = vsyncadd [#allocation10], %s364
          %s367 = sshll.u32 [#allocation11], 4
          %s368 = int_to_ptr.vmem [resolvable:$true] %s367
          %370 = dma.hbm_to_vmem [thread:$0]  %s4, 16, %s368, [#allocation10]
        $region20: #{tpu_custom_call.1} parent=11 // pred_fallthru
          _
        // Predicated region
        $region21: #{tpu_custom_call.1} parent=11 // pred_check
          %p371 = pneg %p175
        $region22: #{tpu_custom_call.1} parent=11 // pred_check_branch
          %373 = sbr.rel (%p371) target = $region24
        $region23: #{tpu_custom_call.1} parent=11 // pred_region
          %s375 = ssub.s32 256, 256
          %376 = vsyncadd [#allocation13], %s375
          %s377 = sshll.u32 [#allocation12], 4
          %s378 = int_to_ptr.vmem [resolvable:$true] %s377
          %383 = dma.hbm_to_vmem [thread:$0]  %s5, 256, %s378, [#allocation13], 64, 64, 4
        $region24: #{tpu_custom_call.1} parent=11 // pred_fallthru
          _
        // Predicated region
        $region25: #{tpu_custom_call.1} parent=11 // pred_check
          %p384 = pneg %p196
        $region26: #{tpu_custom_call.1} parent=11 // pred_check_branch
          %386 = sbr.rel (%p384) target = $region28
        $region27: #{tpu_custom_call.1} parent=11 // pred_region
          %s388 = ssub.s32 16, 16
          %389 = vsyncadd [#allocation13], %s388
          %s391 = sshll.u32 [#allocation14], 4
          %s392 = int_to_ptr.vmem [resolvable:$true] %s391
          %394 = dma.hbm_to_vmem [thread:$0]  %s6, 16, %s392, [#allocation13]
        $region28: #{tpu_custom_call.1} parent=11 // pred_fallthru
          _
        // Predicated region
        $region29: #{tpu_custom_call.1} parent=11 // pred_check
          %p395 = pneg %p217
        $region30: #{tpu_custom_call.1} parent=11 // pred_check_branch
          %397 = sbr.rel (%p395) target = $region32
        $region31: #{tpu_custom_call.1} parent=11 // pred_region
          %s399 = ssub.s32 256, 256
          %400 = vsyncadd [#allocation16], %s399
          %s401 = sshll.u32 [#allocation15], 4
          %s402 = int_to_ptr.vmem [resolvable:$true] %s401
          %407 = dma.hbm_to_vmem [thread:$0]  %s7, 256, %s402, [#allocation16], 64, 64, 4
        $region32: #{tpu_custom_call.1} parent=11 // pred_fallthru
          _
        // Predicated region
        $region33: #{tpu_custom_call.1} parent=11 // pred_check
          %p408 = pneg %p238
        $region34: #{tpu_custom_call.1} parent=11 // pred_check_branch
          %410 = sbr.rel (%p408) target = $region36
        $region35: #{tpu_custom_call.1} parent=11 // pred_region
          %s412 = ssub.s32 16, 16
          %413 = vsyncadd [#allocation16], %s412
          %s415 = sshll.u32 [#allocation17], 4
          %s416 = int_to_ptr.vmem [resolvable:$true] %s415
          %418 = dma.hbm_to_vmem [thread:$0]  %s8, 16, %s416, [#allocation16]
        $region36: #{tpu_custom_call.1} parent=11 // pred_fallthru
          _
        // Predicated region
        $region37: #{tpu_custom_call.1} parent=11 // pred_check
          %p419 = pneg %p259
        $region38: #{tpu_custom_call.1} parent=11 // pred_check_branch
          %421 = sbr.rel (%p419) target = $region40
        $region39: #{tpu_custom_call.1} parent=11 // pred_region
          _
        $region40: #{tpu_custom_call.1} parent=11 // pred_fallthru
          _
        // Predicated region
        $region41: #{tpu_custom_call.1} parent=11 // pred_check
          %p422 = pneg %p280
        $region42: #{tpu_custom_call.1} parent=11 // pred_check_branch
          %424 = sbr.rel (%p422) target = $region44
        $region43: #{tpu_custom_call.1} parent=11 // pred_region
          _
        $region44: #{tpu_custom_call.1} parent=11 // pred_fallthru
          _
      $region12: #{tpu_custom_call.1} parent=5 // pred_fallthru
        _
      %p425 = scmp.lt.s32.totalorder %s34, 4
      // Predicated region
      $region45: #{tpu_custom_call.1} parent=5 // pred_check
        %p426 = pneg %p425
      $region46: #{tpu_custom_call.1} parent=5 // pred_check_branch
        %428 = sbr.rel (%p426) target = $region48
      $region47: #{tpu_custom_call.1} parent=5 // pred_region
        // Predicated region
        $region49: #{tpu_custom_call.1} parent=47 // pred_check
          %p429 = pneg %p54
        $region50: #{tpu_custom_call.1} parent=47 // pred_check_branch
          %431 = sbr.rel (%p429) target = $region52
        $region51: #{tpu_custom_call.1} parent=47 // pred_region
          %s432 = sand.u32 %s44, 1
          %s433 = scalar_lea.sflag [#allocation4], %s432
          %s434 = sand.u32 %s44, 1
          %s435 = smul.addr %s434, 8
          %s436 = scalar_lea.vmem [#allocation3], %s435
          %s438 = ssub.s32 128, 128
          %439 = vsyncadd %s433, %s438
          %s440 = smul.addr %s34, 128
          %s441 = scalar_lea.hbm %s0, %s440
          %s443 = sshll.u32 %s436, 4
          %s444 = int_to_ptr.vmem [resolvable:$true] %s443
          %446 = dma.hbm_to_vmem [thread:$0]  %s441, 128, %s444, %s433
        $region52: #{tpu_custom_call.1} parent=47 // pred_fallthru
          _
        // Predicated region
        $region53: #{tpu_custom_call.1} parent=47 // pred_check
          %p447 = pneg %p80
        $region54: #{tpu_custom_call.1} parent=47 // pred_check_branch
          %449 = sbr.rel (%p447) target = $region56
        $region55: #{tpu_custom_call.1} parent=47 // pred_region
          %s450 = sand.u32 %s34, 1
          %s451 = scalar_lea.sflag [#allocation7], %s450
          %s452 = sand.u32 %s70, 1
          %s453 = smul.addr %s452, 8
          %s454 = scalar_lea.vmem [#allocation6], %s453
          %s456 = ssub.s32 128, 128
          %457 = vsyncadd %s451, %s456
          %s458 = smul.addr %s34, 128
          %s459 = scalar_lea.hbm %s1, %s458
          %s461 = sshll.u32 %s454, 4
          %s462 = int_to_ptr.vmem [resolvable:$true] %s461
          %464 = dma.hbm_to_vmem [thread:$0]  %s459, 128, %s462, %s451
        $region56: #{tpu_custom_call.1} parent=47 // pred_fallthru
          _
        // Predicated region
        $region57: #{tpu_custom_call.1} parent=47 // pred_check
          %p465 = pneg %p106
        $region58: #{tpu_custom_call.1} parent=47 // pred_check_branch
          %467 = sbr.rel (%p465) target = $region60
        $region59: #{tpu_custom_call.1} parent=47 // pred_region
          %s468 = sand.u32 %s34, 1
          %s469 = scalar_lea.sflag [#allocation7], %s468
          %s470 = sand.u32 %s96, 1
          %s471 = smul.addr %s470, 8
          %s472 = scalar_lea.vmem [#allocation8], %s471
          %s474 = ssub.s32 128, 128
          %475 = vsyncadd %s469, %s474
          %s476 = smul.addr %s34, 128
          %s477 = scalar_lea.hbm %s2, %s476
          %s479 = sshll.u32 %s472, 4
          %s480 = int_to_ptr.vmem [resolvable:$true] %s479
          %482 = dma.hbm_to_vmem [thread:$0]  %s477, 128, %s480, %s469
        $region60: #{tpu_custom_call.1} parent=47 // pred_fallthru
          _
      $region48: #{tpu_custom_call.1} parent=5 // pred_fallthru
        _
      %p483 = scmp.le.s32.totalorder 1, %s34
      %p484 = scmp.lt.s32.totalorder %s34, 5
      %p485 = pnand %p483, %p484
      %p486 = pneg %p485
      // Predicated region
      $region61: #{tpu_custom_call.1} parent=5 // pred_check
        _
      $region62: #{tpu_custom_call.1} parent=5 // pred_check_branch
        %488 = sbr.rel (%p485) target = $region64
      $region63: #{tpu_custom_call.1} parent=5 // pred_region
        %s489 = ssub.s32 %s34, 1
        %s490 = sand.u32 %s47, 1
        %s491 = scalar_lea.sflag [#allocation4], %s490
        %s492 = sand.u32 %s47, 1
        %s493 = smul.addr %s492, 8
        %s494 = scalar_lea.vmem [#allocation3], %s493
        // Predicated region
        $region65: #{tpu_custom_call.1} parent=63 // pred_check
          %p495 = pneg %p60
        $region66: #{tpu_custom_call.1} parent=63 // pred_check_branch
          %497 = sbr.rel (%p495) target = $region68
        $region67: #{tpu_custom_call.1} parent=63 // pred_region
          %498 = dma.done %s491, 128
        $region68: #{tpu_custom_call.1} parent=63 // pred_fallthru
          _
        %s499 = sand.u32 %s39, 1
        %s500 = scalar_lea.sflag [#allocation7], %s499
        %s501 = sand.u32 %s73, 1
        %s502 = smul.addr %s501, 8
        %s503 = scalar_lea.vmem [#allocation6], %s502
        // Predicated region
        $region69: #{tpu_custom_call.1} parent=63 // pred_check
          %p504 = pneg %p86
        $region70: #{tpu_custom_call.1} parent=63 // pred_check_branch
          %506 = sbr.rel (%p504) target = $region72
        $region71: #{tpu_custom_call.1} parent=63 // pred_region
          %507 = dma.done %s500, 128
        $region72: #{tpu_custom_call.1} parent=63 // pred_fallthru
          _
        %s508 = sand.u32 %s39, 1
        %s509 = scalar_lea.sflag [#allocation7], %s508
        %s510 = sand.u32 %s99, 1
        %s511 = smul.addr %s510, 8
        %s512 = scalar_lea.vmem [#allocation8], %s511
        // Predicated region
        $region73: #{tpu_custom_call.1} parent=63 // pred_check
          %p513 = pneg %p112
        $region74: #{tpu_custom_call.1} parent=63 // pred_check_branch
          %515 = sbr.rel (%p513) target = $region76
        $region75: #{tpu_custom_call.1} parent=63 // pred_region
          %516 = dma.done %s509, 128
        $region76: #{tpu_custom_call.1} parent=63 // pred_fallthru
          _
        // Predicated region
        $region77: #{tpu_custom_call.1} parent=63 // pred_check
          %p517 = pneg %p133
        $region78: #{tpu_custom_call.1} parent=63 // pred_check_branch
          %519 = sbr.rel (%p517) target = $region80
        $region79: #{tpu_custom_call.1} parent=63 // pred_region
          %520 = dma.done [#allocation10], 256
        $region80: #{tpu_custom_call.1} parent=63 // pred_fallthru
          _
        // Predicated region
        $region81: #{tpu_custom_call.1} parent=63 // pred_check
          %p521 = pneg %p154
        $region82: #{tpu_custom_call.1} parent=63 // pred_check_branch
          %523 = sbr.rel (%p521) target = $region84
        $region83: #{tpu_custom_call.1} parent=63 // pred_region
          %524 = dma.done [#allocation10], 16
        $region84: #{tpu_custom_call.1} parent=63 // pred_fallthru
          _
        // Predicated region
        $region85: #{tpu_custom_call.1} parent=63 // pred_check
          %p525 = pneg %p175
        $region86: #{tpu_custom_call.1} parent=63 // pred_check_branch
          %527 = sbr.rel (%p525) target = $region88
        $region87: #{tpu_custom_call.1} parent=63 // pred_region
          %528 = dma.done [#allocation13], 256
        $region88: #{tpu_custom_call.1} parent=63 // pred_fallthru
          _
        // Predicated region
        $region89: #{tpu_custom_call.1} parent=63 // pred_check
          %p529 = pneg %p196
        $region90: #{tpu_custom_call.1} parent=63 // pred_check_branch
          %531 = sbr.rel (%p529) target = $region92
        $region91: #{tpu_custom_call.1} parent=63 // pred_region
          %532 = dma.done [#allocation13], 16
        $region92: #{tpu_custom_call.1} parent=63 // pred_fallthru
          _
        // Predicated region
        $region93: #{tpu_custom_call.1} parent=63 // pred_check
          %p533 = pneg %p217
        $region94: #{tpu_custom_call.1} parent=63 // pred_check_branch
          %535 = sbr.rel (%p533) target = $region96
        $region95: #{tpu_custom_call.1} parent=63 // pred_region
          %536 = dma.done [#allocation16], 256
        $region96: #{tpu_custom_call.1} parent=63 // pred_fallthru
          _
        // Predicated region
        $region97: #{tpu_custom_call.1} parent=63 // pred_check
          %p537 = pneg %p238
        $region98: #{tpu_custom_call.1} parent=63 // pred_check_branch
          %539 = sbr.rel (%p537) target = $region100
        $region99: #{tpu_custom_call.1} parent=63 // pred_region
          %540 = dma.done [#allocation16], 16
        $region100: #{tpu_custom_call.1} parent=63 // pred_fallthru
          _
        %s541 = sand.u32 %s47, 1
        %s542 = scalar_lea.sflag [#allocation4], %s541
        %s543 = sand.u32 %s47, 1
        %s544 = smul.addr %s543, 8
        %s545 = scalar_lea.vmem [#allocation3], %s544
        %p546 = pneg %p60
        %p547 = pneg %p57
        %s548 = sand.u32 %s39, 1
        %s549 = scalar_lea.sflag [#allocation7], %s548
        %s550 = sand.u32 %s73, 1
        %s551 = smul.addr %s550, 8
        %s552 = scalar_lea.vmem [#allocation6], %s551
        %p553 = pneg %p86
        %p554 = pneg %p83
        %s555 = sand.u32 %s39, 1
        %s556 = scalar_lea.sflag [#allocation7], %s555
        %s557 = sand.u32 %s99, 1
        %s558 = smul.addr %s557, 8
        %s559 = scalar_lea.vmem [#allocation8], %s558
        %p560 = pneg %p112
        %p561 = pneg %p109
        %p562 = pneg %p133
        %p563 = pneg %p130
        %p564 = pneg %p154
        %p565 = pneg %p151
        %p566 = pneg %p175
        %p567 = pneg %p172
        %p568 = pneg %p196
        %p569 = pneg %p193
        %p570 = pneg %p217
        %p571 = pneg %p214
        %p572 = pneg %p238
        %p573 = pneg %p235
        %p574 = pneg %p259
        %p575 = pneg %p256
        %p576 = pneg %p280
        %p577 = pneg %p277
        %p578 = pneg %p306
        %p579 = pneg %p303
        %s580 = sand.u32 %s293, 1
        %s581 = scalar_lea.sflag [#allocation5], %s580
        %s582 = sand.u32 %s293, 1
        %s583 = smul.addr %s582, 8
        %s584 = scalar_lea.vmem [#allocation18], %s583
        %p585 = pneg %p332
        %p586 = pneg %p329
        %s587 = sand.u32 %s319, 1
        %s588 = scalar_lea.sflag [#allocation20], %s587
        %s589 = sand.u32 %s319, 1
        %s590 = smul.addr %s589, 32
        %s591 = scalar_lea.vmem [#allocation19], %s590
        %v593 = vld [vmem:[%s494] sm:$0xff]
        %v594 = vpack.c.bf16 %v593, %v593
        %v595 = vld [vmem:[%s503] sm:$0xff]
        %v596 = vpack.c.bf16 %v595, %v595
        %v597 = vld [vmem:[%s512] sm:$0xff]
        %v598 = vpack.c.bf16 %v597, %v597
        %v599 = vld [vmem:[#allocation9] sm:$0xf]
        %v600 = vld [vmem:[#allocation9 + $0x4] sm:$0xf]
        %v601 = vld [vmem:[#allocation9 + $0x8] sm:$0xf]
        %v602 = vld [vmem:[#allocation9 + $0xc] sm:$0xf]
        %v603 = vld [vmem:[#allocation11] sm:$0x1]
        %v605 = vlaneseq
        %v606 = vshrl.u32 %v605, 7
        %v607 = vsub.s32 0, %v606
        %v608 = vrot.slane %v603, %v607
        %v614 = vunpack.c.l.b16 %v599
        %v615 = vunpack.c.l.b16 %v600
        %v616 = vunpack.c.l.b16 %v601
        %v617 = vunpack.c.l.b16 %v602
        %v618 = vpack.c.b16 %v615, %v614
        %v619 = vpack.c.b16 %v617, %v616
        %vm622 = vcmask 261120
        %v624 = vsel %vm622, %v594, 0
        %626 = vmatprep.subr.bf16.mxu0 0
        %627 = vmatpush1.bf16.msra.mxu0 0
        %628 = vmatprep.subr.bf16.mxu0 0
        %629 = vmatpush1.bf16.msra.mxu0 0
        %630 = vmatprep.subr.bf16.mxu0 0
        %631 = vmatpush1.bf16.msra.mxu0 0
        %632 = vmatprep.subr.bf16.mxu0 0
        %633 = vmatpush1.bf16.msra.mxu0 0
        %634 = vmatprep.subr.bf16.mxu0 0
        %635 = vmatpush1.bf16.msra.mxu0 0
        %636 = vmatprep.subr.bf16.mxu0 0
        %637 = vmatpush1.bf16.msra.mxu0 0
        %638 = vmatprep.subr.bf16.mxu0 0
        %639 = vmatpush1.bf16.msra.mxu0 %v619
        %640 = vmatprep.subr.bf16.mxu0 0
        %641 = vmatpush1.bf16.msra.mxu0 %v618
        %642 = vmatprep.subr.bf16.mxu0 0
        %643 = vmatpush2.bf16.msra.mxu0 0
        %644 = vmatprep.subr.bf16.mxu0 0
        %645 = vmatpush2.bf16.msra.mxu0 0
        %646 = vmatprep.subr.bf16.mxu0 0
        %647 = vmatpush2.bf16.msra.mxu0 0
        %648 = vmatprep.subr.bf16.mxu0 0
        %649 = vmatpush2.bf16.msra.mxu0 0
        %650 = vmatprep.subr.bf16.mxu0 0
        %651 = vmatpush2.bf16.msra.mxu0 0
        %652 = vmatprep.subr.bf16.mxu0 0
        %653 = vmatpush2.bf16.msra.mxu0 0
        %654 = vmatprep.subr.bf16.mxu0 0
        %655 = vmatpush2.bf16.msra.mxu0 0
        %656 = vmatprep.subr.bf16.mxu0 0
        %657 = vmatpush2.bf16.msra.mxu0 0
        %658 = vmatprep.mubr.bf16.mxu0 0
        %659 = vmatmul.mubr.bf16.gmra.mxu0 %v624
        %v660 = vpop.f32.mrf.mxu0
        %v661 = vadd.f32 %v608, %v660
        %v662 = vpop.f32.mrf.mxu0
        %v663 = vpop.f32.mrf.mxu0
        %v664 = vpop.f32.mrf.mxu0
        %665 = vdwg.mxu0
        %v666 = vpack.c.bf16 %v661, %v661
        %v667 = vld [vmem:[#allocation12] sm:$0xf]
        %v668 = vld [vmem:[#allocation12 + $0x4] sm:$0xf]
        %v669 = vld [vmem:[#allocation12 + $0x8] sm:$0xf]
        %v670 = vld [vmem:[#allocation12 + $0xc] sm:$0xf]
        %v671 = vld [vmem:[#allocation14] sm:$0x1]
        %v673 = vlaneseq
        %v674 = vshrl.u32 %v673, 7
        %v675 = vsub.s32 0, %v674
        %v676 = vrot.slane %v671, %v675
        %v682 = vunpack.c.l.b16 %v667
        %v683 = vunpack.c.l.b16 %v668
        %v684 = vunpack.c.l.b16 %v669
        %v685 = vunpack.c.l.b16 %v670
        %v686 = vpack.c.b16 %v683, %v682
        %v687 = vpack.c.b16 %v685, %v684
        %v691 = vsel %vm622, %v596, 0
        %693 = vmatprep.subr.bf16.mxu0 0
        %694 = vmatpush1.bf16.msra.mxu0 0
        %695 = vmatprep.subr.bf16.mxu0 0
        %696 = vmatpush1.bf16.msra.mxu0 0
        %697 = vmatprep.subr.bf16.mxu0 0
        %698 = vmatpush1.bf16.msra.mxu0 0
        %699 = vmatprep.subr.bf16.mxu0 0
        %700 = vmatpush1.bf16.msra.mxu0 0
        %701 = vmatprep.subr.bf16.mxu0 0
        %702 = vmatpush1.bf16.msra.mxu0 0
        %703 = vmatprep.subr.bf16.mxu0 0
        %704 = vmatpush1.bf16.msra.mxu0 0
        %705 = vmatprep.subr.bf16.mxu0 0
        %706 = vmatpush1.bf16.msra.mxu0 %v687
        %707 = vmatprep.subr.bf16.mxu0 0
        %708 = vmatpush1.bf16.msra.mxu0 %v686
        %709 = vmatprep.subr.bf16.mxu0 0
        %710 = vmatpush2.bf16.msra.mxu0 0
        %711 = vmatprep.subr.bf16.mxu0 0
        %712 = vmatpush2.bf16.msra.mxu0 0
        %713 = vmatprep.subr.bf16.mxu0 0
        %714 = vmatpush2.bf16.msra.mxu0 0
        %715 = vmatprep.subr.bf16.mxu0 0
        %716 = vmatpush2.bf16.msra.mxu0 0
        %717 = vmatprep.subr.bf16.mxu0 0
        %718 = vmatpush2.bf16.msra.mxu0 0
        %719 = vmatprep.subr.bf16.mxu0 0
        %720 = vmatpush2.bf16.msra.mxu0 0
        %721 = vmatprep.subr.bf16.mxu0 0
        %722 = vmatpush2.bf16.msra.mxu0 0
        %723 = vmatprep.subr.bf16.mxu0 0
        %724 = vmatpush2.bf16.msra.mxu0 0
        %725 = vmatprep.mubr.bf16.mxu0 0
        %726 = vmatmul.mubr.bf16.gmra.mxu0 %v691
        %v727 = vpop.f32.mrf.mxu0
        %v728 = vadd.f32 %v676, %v727
        %v729 = vpop.f32.mrf.mxu0
        %v730 = vpop.f32.mrf.mxu0
        %v731 = vpop.f32.mrf.mxu0
        %732 = vdwg.mxu0
        %v733 = vpack.c.bf16 %v728, %v728
        %v734 = vld [vmem:[#allocation15] sm:$0xf]
        %v735 = vld [vmem:[#allocation15 + $0x4] sm:$0xf]
        %v736 = vld [vmem:[#allocation15 + $0x8] sm:$0xf]
        %v737 = vld [vmem:[#allocation15 + $0xc] sm:$0xf]
        %v738 = vld [vmem:[#allocation17] sm:$0x1]
        %v740 = vlaneseq
        %v741 = vshrl.u32 %v740, 7
        %v742 = vsub.s32 0, %v741
        %v743 = vrot.slane %v738, %v742
        %v749 = vunpack.c.l.b16 %v734
        %v750 = vunpack.c.l.b16 %v735
        %v751 = vunpack.c.l.b16 %v736
        %v752 = vunpack.c.l.b16 %v737
        %v753 = vpack.c.b16 %v750, %v749
        %v754 = vpack.c.b16 %v752, %v751
        %v758 = vsel %vm622, %v598, 0
        %760 = vmatprep.subr.bf16.mxu0 0
        %761 = vmatpush1.bf16.msra.mxu0 0
        %762 = vmatprep.subr.bf16.mxu0 0
        %763 = vmatpush1.bf16.msra.mxu0 0
        %764 = vmatprep.subr.bf16.mxu0 0
        %765 = vmatpush1.bf16.msra.mxu0 0
        %766 = vmatprep.subr.bf16.mxu0 0
        %767 = vmatpush1.bf16.msra.mxu0 0
        %768 = vmatprep.subr.bf16.mxu0 0
        %769 = vmatpush1.bf16.msra.mxu0 0
        %770 = vmatprep.subr.bf16.mxu0 0
        %771 = vmatpush1.bf16.msra.mxu0 0
        %772 = vmatprep.subr.bf16.mxu0 0
        %773 = vmatpush1.bf16.msra.mxu0 %v754
        %774 = vmatprep.subr.bf16.mxu0 0
        %775 = vmatpush1.bf16.msra.mxu0 %v753
        %776 = vmatprep.subr.bf16.mxu0 0
        %777 = vmatpush2.bf16.msra.mxu0 0
        %778 = vmatprep.subr.bf16.mxu0 0
        %779 = vmatpush2.bf16.msra.mxu0 0
        %780 = vmatprep.subr.bf16.mxu0 0
        %781 = vmatpush2.bf16.msra.mxu0 0
        %782 = vmatprep.subr.bf16.mxu0 0
        %783 = vmatpush2.bf16.msra.mxu0 0
        %784 = vmatprep.subr.bf16.mxu0 0
        %785 = vmatpush2.bf16.msra.mxu0 0
        %786 = vmatprep.subr.bf16.mxu0 0
        %787 = vmatpush2.bf16.msra.mxu0 0
        %788 = vmatprep.subr.bf16.mxu0 0
        %789 = vmatpush2.bf16.msra.mxu0 0
        %790 = vmatprep.subr.bf16.mxu0 0
        %791 = vmatpush2.bf16.msra.mxu0 0
        %792 = vmatprep.mubr.bf16.mxu0 0
        %793 = vmatmul.mubr.bf16.gmra.mxu0 %v758
        %v794 = vpop.f32.mrf.mxu0
        %v795 = vadd.f32 %v743, %v794
        %v796 = vpop.f32.mrf.mxu0
        %v797 = vpop.f32.mrf.mxu0
        %v798 = vpop.f32.mrf.mxu0
        %799 = vdwg.mxu0
        %v800 = vpack.c.bf16 %v795, %v795
        %vm801 = vcmask 64512
        %v803 = vsel %vm801, %v666, 0
        %v806 = vsel %vm801, %v733, 0
        %808 = vmatprep.subr.bf16.mxu0 0
        %809 = vmatpush1.bf16.xpose.msra.mxu0 0
        %810 = vmatprep.subr.bf16.mxu0 0
        %811 = vmatpush1.bf16.xpose.msra.mxu0 0
        %812 = vmatprep.subr.bf16.mxu0 0
        %813 = vmatpush1.bf16.xpose.msra.mxu0 0
        %814 = vmatprep.subr.bf16.mxu0 0
        %815 = vmatpush1.bf16.xpose.msra.mxu0 0
        %816 = vmatprep.subr.bf16.mxu0 0
        %817 = vmatpush1.bf16.xpose.msra.mxu0 0
        %818 = vmatprep.subr.bf16.mxu0 0
        %819 = vmatpush1.bf16.xpose.msra.mxu0 0
        %820 = vmatprep.subr.bf16.mxu0 0
        %821 = vmatpush1.bf16.xpose.msra.mxu0 0
        %822 = vmatprep.subr.bf16.mxu0 0
        %823 = vmatpush1.bf16.xpose.msra.mxu0 %v806
        %824 = vmatprep.subr.bf16.mxu0 0
        %825 = vmatpush2.bf16.xpose.msra.mxu0 0
        %826 = vmatprep.subr.bf16.mxu0 0
        %827 = vmatpush2.bf16.xpose.msra.mxu0 0
        %828 = vmatprep.subr.bf16.mxu0 0
        %829 = vmatpush2.bf16.xpose.msra.mxu0 0
        %830 = vmatprep.subr.bf16.mxu0 0
        %831 = vmatpush2.bf16.xpose.msra.mxu0 0
        %832 = vmatprep.subr.bf16.mxu0 0
        %833 = vmatpush2.bf16.xpose.msra.mxu0 0
        %834 = vmatprep.subr.bf16.mxu0 0
        %835 = vmatpush2.bf16.xpose.msra.mxu0 0
        %836 = vmatprep.subr.bf16.mxu0 0
        %837 = vmatpush2.bf16.xpose.msra.mxu0 0
        %838 = vmatprep.subr.bf16.mxu0 0
        %839 = vmatpush2.bf16.xpose.msra.mxu0 0
        %840 = vmatprep.mubr.bf16.mxu0 0
        %841 = vmatmul.mubr.bf16.gmra.mxu0 %v803
        %v842 = vpop.f32.mrf.mxu0
        %v843 = vadd.f32 0.0, %v842
        %v844 = vpop.f32.mrf.mxu0
        %v845 = vpop.f32.mrf.mxu0
        %v846 = vpop.f32.mrf.mxu0
        %847 = vdwg.mxu0
        %v848 = vsel %vm801, %v843, -inf
        %849 = vmax.xlane.f32.xlu0 %v848
        %v850 = vpop.xlane.xlu0 %849
        %v851 = vsub.f32 %v843, %v850
        %v852 = vmul.f32 %v851, 1.442695
        %v853 = vpow.pop %v852
        %v854 = vsel %vm801, %v853, 0.0
        %855 = vadd.xlane.f32.xlu0 %v854
        %v856 = vpop.xlane.xlu0 %855
        %v857 = vrcp.pop %v856
        %v858 = vmul.f32 %v853, %v857
        %859 = vst.msk [vmem:[%s591] sm:$0xff] %vm801, %v858
        %v860 = vpack.c.bf16 %v858, %v858
        %v862 = vsel %vm801, %v860, 0
        %vm864 = vcmask 1043456
        %v866 = vsel %vm864, %v800, 0
        %868 = vmatprep.subr.bf16.mxu0 0
        %869 = vmatpush1.bf16.msra.mxu0 0
        %870 = vmatprep.subr.bf16.mxu0 0
        %871 = vmatpush1.bf16.msra.mxu0 0
        %872 = vmatprep.subr.bf16.mxu0 0
        %873 = vmatpush1.bf16.msra.mxu0 0
        %874 = vmatprep.subr.bf16.mxu0 0
        %875 = vmatpush1.bf16.msra.mxu0 0
        %876 = vmatprep.subr.bf16.mxu0 0
        %877 = vmatpush1.bf16.msra.mxu0 0
        %878 = vmatprep.subr.bf16.mxu0 0
        %879 = vmatpush1.bf16.msra.mxu0 0
        %880 = vmatprep.subr.bf16.mxu0 0
        %881 = vmatpush1.bf16.msra.mxu0 0
        %882 = vmatprep.subr.bf16.mxu0 0
        %883 = vmatpush1.bf16.msra.mxu0 %v866
        %884 = vmatprep.subr.bf16.mxu0 0
        %885 = vmatpush2.bf16.msra.mxu0 0
        %886 = vmatprep.subr.bf16.mxu0 0
        %887 = vmatpush2.bf16.msra.mxu0 0
        %888 = vmatprep.subr.bf16.mxu0 0
        %889 = vmatpush2.bf16.msra.mxu0 0
        %890 = vmatprep.subr.bf16.mxu0 0
        %891 = vmatpush2.bf16.msra.mxu0 0
        %892 = vmatprep.subr.bf16.mxu0 0
        %893 = vmatpush2.bf16.msra.mxu0 0
        %894 = vmatprep.subr.bf16.mxu0 0
        %895 = vmatpush2.bf16.msra.mxu0 0
        %896 = vmatprep.subr.bf16.mxu0 0
        %897 = vmatpush2.bf16.msra.mxu0 0
        %898 = vmatprep.subr.bf16.mxu0 0
        %899 = vmatpush2.bf16.msra.mxu0 0
        %900 = vmatprep.mubr.bf16.mxu0 0
        %901 = vmatmul.mubr.bf16.gmra.mxu0 %v862
        %v902 = vpop.f32.mrf.mxu0
        %v903 = vadd.f32 0.0, %v902
        %v904 = vpop.f32.mrf.mxu0
        %v905 = vpop.f32.mrf.mxu0
        %v906 = vpop.f32.mrf.mxu0
        %907 = vdwg.mxu0
        %908 = vst.msk [vmem:[#allocation2] sm:$0xff] %vm801, %v903
        %910 = vrot.lane.b32.xlu0 %v666, 120
        %v911 = vpop.permute.xlu0 %910
        %913 = vrot.lane.b32.xlu0 %v733, 120
        %v914 = vpop.permute.xlu0 %913
        %v916 = vsel %vm801, %v911, 0
        %v919 = vsel %vm801, %v914, 0
        %921 = vmatprep.subr.bf16.mxu0 0
        %922 = vmatpush1.bf16.xpose.msra.mxu0 0
        %923 = vmatprep.subr.bf16.mxu0 0
        %924 = vmatpush1.bf16.xpose.msra.mxu0 0
        %925 = vmatprep.subr.bf16.mxu0 0
        %926 = vmatpush1.bf16.xpose.msra.mxu0 0
        %927 = vmatprep.subr.bf16.mxu0 0
        %928 = vmatpush1.bf16.xpose.msra.mxu0 0
        %929 = vmatprep.subr.bf16.mxu0 0
        %930 = vmatpush1.bf16.xpose.msra.mxu0 0
        %931 = vmatprep.subr.bf16.mxu0 0
        %932 = vmatpush1.bf16.xpose.msra.mxu0 0
        %933 = vmatprep.subr.bf16.mxu0 0
        %934 = vmatpush1.bf16.xpose.msra.mxu0 0
        %935 = vmatprep.subr.bf16.mxu0 0
        %936 = vmatpush1.bf16.xpose.msra.mxu0 %v919
        %937 = vmatprep.subr.bf16.mxu0 0
        %938 = vmatpush2.bf16.xpose.msra.mxu0 0
        %939 = vmatprep.subr.bf16.mxu0 0
        %940 = vmatpush2.bf16.xpose.msra.mxu0 0
        %941 = vmatprep.subr.bf16.mxu0 0
        %942 = vmatpush2.bf16.xpose.msra.mxu0 0
        %943 = vmatprep.subr.bf16.mxu0 0
        %944 = vmatpush2.bf16.xpose.msra.mxu0 0
        %945 = vmatprep.subr.bf16.mxu0 0
        %946 = vmatpush2.bf16.xpose.msra.mxu0 0
        %947 = vmatprep.subr.bf16.mxu0 0
        %948 = vmatpush2.bf16.xpose.msra.mxu0 0
        %949 = vmatprep.subr.bf16.mxu0 0
        %950 = vmatpush2.bf16.xpose.msra.mxu0 0
        %951 = vmatprep.subr.bf16.mxu0 0
        %952 = vmatpush2.bf16.xpose.msra.mxu0 0
        %953 = vmatprep.mubr.bf16.mxu0 0
        %954 = vmatmul.mubr.bf16.gmra.mxu0 %v916
        %v955 = vpop.f32.mrf.mxu0
        %v956 = vadd.f32 0.0, %v955
        %v957 = vpop.f32.mrf.mxu0
        %v958 = vpop.f32.mrf.mxu0
        %v959 = vpop.f32.mrf.mxu0
        %960 = vdwg.mxu0
        %v961 = vsel %vm801, %v956, -inf
        %962 = vmax.xlane.f32.xlu0 %v961
        %v963 = vpop.xlane.xlu0 %962
        %v964 = vsub.f32 %v956, %v963
        %v965 = vmul.f32 %v964, 1.442695
        %v966 = vpow.pop %v965
        %v967 = vsel %vm801, %v966, 0.0
        %968 = vadd.xlane.f32.xlu0 %v967
        %v969 = vpop.xlane.xlu0 %968
        %v970 = vrcp.pop %v969
        %v971 = vmul.f32 %v966, %v970
        %s972 = scalar_lea.vmem %s591, 8 [#allocation19]
        %973 = vst.msk [vmem:[%s972] sm:$0xff] %vm801, %v971
        %v974 = vpack.c.bf16 %v971, %v971
        %976 = vrot.lane.b32.xlu0 %v800, 120
        %v977 = vpop.permute.xlu0 %976
        %v979 = vsel %vm801, %v974, 0
        %v982 = vsel %vm864, %v977, 0
        %984 = vmatprep.subr.bf16.mxu0 0
        %985 = vmatpush1.bf16.msra.mxu0 0
        %986 = vmatprep.subr.bf16.mxu0 0
        %987 = vmatpush1.bf16.msra.mxu0 0
        %988 = vmatprep.subr.bf16.mxu0 0
        %989 = vmatpush1.bf16.msra.mxu0 0
        %990 = vmatprep.subr.bf16.mxu0 0
        %991 = vmatpush1.bf16.msra.mxu0 0
        %992 = vmatprep.subr.bf16.mxu0 0
        %993 = vmatpush1.bf16.msra.mxu0 0
        %994 = vmatprep.subr.bf16.mxu0 0
        %995 = vmatpush1.bf16.msra.mxu0 0
        %996 = vmatprep.subr.bf16.mxu0 0
        %997 = vmatpush1.bf16.msra.mxu0 0
        %998 = vmatprep.subr.bf16.mxu0 0
        %999 = vmatpush1.bf16.msra.mxu0 %v982
        %1000 = vmatprep.subr.bf16.mxu0 0
        %1001 = vmatpush2.bf16.msra.mxu0 0
        %1002 = vmatprep.subr.bf16.mxu0 0
        %1003 = vmatpush2.bf16.msra.mxu0 0
        %1004 = vmatprep.subr.bf16.mxu0 0
        %1005 = vmatpush2.bf16.msra.mxu0 0
        %1006 = vmatprep.subr.bf16.mxu0 0
        %1007 = vmatpush2.bf16.msra.mxu0 0
        %1008 = vmatprep.subr.bf16.mxu0 0
        %1009 = vmatpush2.bf16.msra.mxu0 0
        %1010 = vmatprep.subr.bf16.mxu0 0
        %1011 = vmatpush2.bf16.msra.mxu0 0
        %1012 = vmatprep.subr.bf16.mxu0 0
        %1013 = vmatpush2.bf16.msra.mxu0 0
        %1014 = vmatprep.subr.bf16.mxu0 0
        %1015 = vmatpush2.bf16.msra.mxu0 0
        %1016 = vmatprep.mubr.bf16.mxu0 0
        %1017 = vmatmul.mubr.bf16.gmra.mxu0 %v979
        %v1018 = vpop.f32.mrf.mxu0
        %v1019 = vadd.f32 0.0, %v1018
        %v1020 = vpop.f32.mrf.mxu0
        %v1021 = vpop.f32.mrf.mxu0
        %v1022 = vpop.f32.mrf.mxu0
        %1023 = vdwg.mxu0
        %1025 = vrot.lane.b32.xlu0 %v1019, 8
        %v1026 = vpop.permute.xlu0 %1025
        %vm1028 = vcmask 130112
        %1029 = vst.msk [vmem:[#allocation2] sm:$0xff] %vm1028, %v1026
        %1030 = vrot.lane.b32.xlu0 %v666, 112
        %v1031 = vpop.permute.xlu0 %1030
        %1032 = vrot.lane.b32.xlu0 %v733, 112
        %v1033 = vpop.permute.xlu0 %1032
        %v1035 = vsel %vm801, %v1031, 0
        %v1038 = vsel %vm801, %v1033, 0
        %1040 = vmatprep.subr.bf16.mxu0 0
        %1041 = vmatpush1.bf16.xpose.msra.mxu0 0
        %1042 = vmatprep.subr.bf16.mxu0 0
        %1043 = vmatpush1.bf16.xpose.msra.mxu0 0
        %1044 = vmatprep.subr.bf16.mxu0 0
        %1045 = vmatpush1.bf16.xpose.msra.mxu0 0
        %1046 = vmatprep.subr.bf16.mxu0 0
        %1047 = vmatpush1.bf16.xpose.msra.mxu0 0
        %1048 = vmatprep.subr.bf16.mxu0 0
        %1049 = vmatpush1.bf16.xpose.msra.mxu0 0
        %1050 = vmatprep.subr.bf16.mxu0 0
        %1051 = vmatpush1.bf16.xpose.msra.mxu0 0
        %1052 = vmatprep.subr.bf16.mxu0 0
        %1053 = vmatpush1.bf16.xpose.msra.mxu0 0
        %1054 = vmatprep.subr.bf16.mxu0 0
        %1055 = vmatpush1.bf16.xpose.msra.mxu0 %v1038
        %1056 = vmatprep.subr.bf16.mxu0 0
        %1057 = vmatpush2.bf16.xpose.msra.mxu0 0
        %1058 = vmatprep.subr.bf16.mxu0 0
        %1059 = vmatpush2.bf16.xpose.msra.mxu0 0
        %1060 = vmatprep.subr.bf16.mxu0 0
        %1061 = vmatpush2.bf16.xpose.msra.mxu0 0
        %1062 = vmatprep.subr.bf16.mxu0 0
        %1063 = vmatpush2.bf16.xpose.msra.mxu0 0
        %1064 = vmatprep.subr.bf16.mxu0 0
        %1065 = vmatpush2.bf16.xpose.msra.mxu0 0
        %1066 = vmatprep.subr.bf16.mxu0 0
        %1067 = vmatpush2.bf16.xpose.msra.mxu0 0
        %1068 = vmatprep.subr.bf16.mxu0 0
        %1069 = vmatpush2.bf16.xpose.msra.mxu0 0
        %1070 = vmatprep.subr.bf16.mxu0 0
        %1071 = vmatpush2.bf16.xpose.msra.mxu0 0
        %1072 = vmatprep.mubr.bf16.mxu0 0
        %1073 = vmatmul.mubr.bf16.gmra.mxu0 %v1035
        %v1074 = vpop.f32.mrf.mxu0
        %v1075 = vadd.f32 0.0, %v1074
        %v1076 = vpop.f32.mrf.mxu0
        %v1077 = vpop.f32.mrf.mxu0
        %v1078 = vpop.f32.mrf.mxu0
        %1079 = vdwg.mxu0
        %v1080 = vsel %vm801, %v1075, -inf
        %1081 = vmax.xlane.f32.xlu0 %v1080
        %v1082 = vpop.xlane.xlu0 %1081
        %v1083 = vsub.f32 %v1075, %v1082
        %v1084 = vmul.f32 %v1083, 1.442695
        %v1085 = vpow.pop %v1084
        %v1086 = vsel %vm801, %v1085, 0.0
        %1087 = vadd.xlane.f32.xlu0 %v1086
        %v1088 = vpop.xlane.xlu0 %1087
        %v1089 = vrcp.pop %v1088
        %v1090 = vmul.f32 %v1085, %v1089
        %s1091 = scalar_lea.vmem %s591, 16 [#allocation19]
        %1092 = vst.msk [vmem:[%s1091] sm:$0xff] %vm801, %v1090
        %v1093 = vpack.c.bf16 %v1090, %v1090
        %1094 = vrot.lane.b32.xlu0 %v800, 112
        %v1095 = vpop.permute.xlu0 %1094
        %v1097 = vsel %vm801, %v1093, 0
        %v1100 = vsel %vm864, %v1095, 0
        %1102 = vmatprep.subr.bf16.mxu0 0
        %1103 = vmatpush1.bf16.msra.mxu0 0
        %1104 = vmatprep.subr.bf16.mxu0 0
        %1105 = vmatpush1.bf16.msra.mxu0 0
        %1106 = vmatprep.subr.bf16.mxu0 0
        %1107 = vmatpush1.bf16.msra.mxu0 0
        %1108 = vmatprep.subr.bf16.mxu0 0
        %1109 = vmatpush1.bf16.msra.mxu0 0
        %1110 = vmatprep.subr.bf16.mxu0 0
        %1111 = vmatpush1.bf16.msra.mxu0 0
        %1112 = vmatprep.subr.bf16.mxu0 0
        %1113 = vmatpush1.bf16.msra.mxu0 0
        %1114 = vmatprep.subr.bf16.mxu0 0
        %1115 = vmatpush1.bf16.msra.mxu0 0
        %1116 = vmatprep.subr.bf16.mxu0 0
        %1117 = vmatpush1.bf16.msra.mxu0 %v1100
        %1118 = vmatprep.subr.bf16.mxu0 0
        %1119 = vmatpush2.bf16.msra.mxu0 0
        %1120 = vmatprep.subr.bf16.mxu0 0
        %1121 = vmatpush2.bf16.msra.mxu0 0
        %1122 = vmatprep.subr.bf16.mxu0 0
        %1123 = vmatpush2.bf16.msra.mxu0 0
        %1124 = vmatprep.subr.bf16.mxu0 0
        %1125 = vmatpush2.bf16.msra.mxu0 0
        %1126 = vmatprep.subr.bf16.mxu0 0
        %1127 = vmatpush2.bf16.msra.mxu0 0
        %1128 = vmatprep.subr.bf16.mxu0 0
        %1129 = vmatpush2.bf16.msra.mxu0 0
        %1130 = vmatprep.subr.bf16.mxu0 0
        %1131 = vmatpush2.bf16.msra.mxu0 0
        %1132 = vmatprep.subr.bf16.mxu0 0
        %1133 = vmatpush2.bf16.msra.mxu0 0
        %1134 = vmatprep.mubr.bf16.mxu0 0
        %1135 = vmatmul.mubr.bf16.gmra.mxu0 %v1097
        %v1136 = vpop.f32.mrf.mxu0
        %v1137 = vadd.f32 0.0, %v1136
        %v1138 = vpop.f32.mrf.mxu0
        %v1139 = vpop.f32.mrf.mxu0
        %v1140 = vpop.f32.mrf.mxu0
        %1141 = vdwg.mxu0
        %1143 = vrot.lane.b32.xlu0 %v1137, 16
        %v1144 = vpop.permute.xlu0 %1143
        %vm1146 = vcmask 195712
        %1147 = vst.msk [vmem:[#allocation2] sm:$0xff] %vm1146, %v1144
        %1148 = vrot.lane.b32.xlu0 %v666, 104
        %v1149 = vpop.permute.xlu0 %1148
        %1150 = vrot.lane.b32.xlu0 %v733, 104
        %v1151 = vpop.permute.xlu0 %1150
        %v1153 = vsel %vm801, %v1149, 0
        %v1156 = vsel %vm801, %v1151, 0
        %1158 = vmatprep.subr.bf16.mxu0 0
        %1159 = vmatpush1.bf16.xpose.msra.mxu0 0
        %1160 = vmatprep.subr.bf16.mxu0 0
        %1161 = vmatpush1.bf16.xpose.msra.mxu0 0
        %1162 = vmatprep.subr.bf16.mxu0 0
        %1163 = vmatpush1.bf16.xpose.msra.mxu0 0
        %1164 = vmatprep.subr.bf16.mxu0 0
        %1165 = vmatpush1.bf16.xpose.msra.mxu0 0
        %1166 = vmatprep.subr.bf16.mxu0 0
        %1167 = vmatpush1.bf16.xpose.msra.mxu0 0
        %1168 = vmatprep.subr.bf16.mxu0 0
        %1169 = vmatpush1.bf16.xpose.msra.mxu0 0
        %1170 = vmatprep.subr.bf16.mxu0 0
        %1171 = vmatpush1.bf16.xpose.msra.mxu0 0
        %1172 = vmatprep.subr.bf16.mxu0 0
        %1173 = vmatpush1.bf16.xpose.msra.mxu0 %v1156
        %1174 = vmatprep.subr.bf16.mxu0 0
        %1175 = vmatpush2.bf16.xpose.msra.mxu0 0
        %1176 = vmatprep.subr.bf16.mxu0 0
        %1177 = vmatpush2.bf16.xpose.msra.mxu0 0
        %1178 = vmatprep.subr.bf16.mxu0 0
        %1179 = vmatpush2.bf16.xpose.msra.mxu0 0
        %1180 = vmatprep.subr.bf16.mxu0 0
        %1181 = vmatpush2.bf16.xpose.msra.mxu0 0
        %1182 = vmatprep.subr.bf16.mxu0 0
        %1183 = vmatpush2.bf16.xpose.msra.mxu0 0
        %1184 = vmatprep.subr.bf16.mxu0 0
        %1185 = vmatpush2.bf16.xpose.msra.mxu0 0
        %1186 = vmatprep.subr.bf16.mxu0 0
        %1187 = vmatpush2.bf16.xpose.msra.mxu0 0
        %1188 = vmatprep.subr.bf16.mxu0 0
        %1189 = vmatpush2.bf16.xpose.msra.mxu0 0
        %1190 = vmatprep.mubr.bf16.mxu0 0
        %1191 = vmatmul.mubr.bf16.gmra.mxu0 %v1153
        %v1192 = vpop.f32.mrf.mxu0
        %v1193 = vadd.f32 0.0, %v1192
        %v1194 = vpop.f32.mrf.mxu0
        %v1195 = vpop.f32.mrf.mxu0
        %v1196 = vpop.f32.mrf.mxu0
        %1197 = vdwg.mxu0
        %v1198 = vsel %vm801, %v1193, -inf
        %1199 = vmax.xlane.f32.xlu0 %v1198
        %v1200 = vpop.xlane.xlu0 %1199
        %v1201 = vsub.f32 %v1193, %v1200
        %v1202 = vmul.f32 %v1201, 1.442695
        %v1203 = vpow.pop %v1202
        %v1204 = vsel %vm801, %v1203, 0.0
        %1205 = vadd.xlane.f32.xlu0 %v1204
        %v1206 = vpop.xlane.xlu0 %1205
        %v1207 = vrcp.pop %v1206
        %v1208 = vmul.f32 %v1203, %v1207
        %s1209 = scalar_lea.vmem %s591, 24 [#allocation19]
        %1210 = vst.msk [vmem:[%s1209] sm:$0xff] %vm801, %v1208
        %v1211 = vpack.c.bf16 %v1208, %v1208
        %1212 = vrot.lane.b32.xlu0 %v800, 104
        %v1213 = vpop.permute.xlu0 %1212
        %v1215 = vsel %vm801, %v1211, 0
        %v1218 = vsel %vm864, %v1213, 0
        %1220 = vmatprep.subr.bf16.mxu0 0
        %1221 = vmatpush1.bf16.msra.mxu0 0
        %1222 = vmatprep.subr.bf16.mxu0 0
        %1223 = vmatpush1.bf16.msra.mxu0 0
        %1224 = vmatprep.subr.bf16.mxu0 0
        %1225 = vmatpush1.bf16.msra.mxu0 0
        %1226 = vmatprep.subr.bf16.mxu0 0
        %1227 = vmatpush1.bf16.msra.mxu0 0
        %1228 = vmatprep.subr.bf16.mxu0 0
        %1229 = vmatpush1.bf16.msra.mxu0 0
        %1230 = vmatprep.subr.bf16.mxu0 0
        %1231 = vmatpush1.bf16.msra.mxu0 0
        %1232 = vmatprep.subr.bf16.mxu0 0
        %1233 = vmatpush1.bf16.msra.mxu0 0
        %1234 = vmatprep.subr.bf16.mxu0 0
        %1235 = vmatpush1.bf16.msra.mxu0 %v1218
        %1236 = vmatprep.subr.bf16.mxu0 0
        %1237 = vmatpush2.bf16.msra.mxu0 0
        %1238 = vmatprep.subr.bf16.mxu0 0
        %1239 = vmatpush2.bf16.msra.mxu0 0
        %1240 = vmatprep.subr.bf16.mxu0 0
        %1241 = vmatpush2.bf16.msra.mxu0 0
        %1242 = vmatprep.subr.bf16.mxu0 0
        %1243 = vmatpush2.bf16.msra.mxu0 0
        %1244 = vmatprep.subr.bf16.mxu0 0
        %1245 = vmatpush2.bf16.msra.mxu0 0
        %1246 = vmatprep.subr.bf16.mxu0 0
        %1247 = vmatpush2.bf16.msra.mxu0 0
        %1248 = vmatprep.subr.bf16.mxu0 0
        %1249 = vmatpush2.bf16.msra.mxu0 0
        %1250 = vmatprep.subr.bf16.mxu0 0
        %1251 = vmatpush2.bf16.msra.mxu0 0
        %1252 = vmatprep.mubr.bf16.mxu0 0
        %1253 = vmatmul.mubr.bf16.gmra.mxu0 %v1215
        %v1254 = vpop.f32.mrf.mxu0
        %v1255 = vadd.f32 0.0, %v1254
        %v1256 = vpop.f32.mrf.mxu0
        %v1257 = vpop.f32.mrf.mxu0
        %v1258 = vpop.f32.mrf.mxu0
        %1259 = vdwg.mxu0
        %1261 = vrot.lane.b32.xlu0 %v1255, 24
        %v1262 = vpop.permute.xlu0 %1261
        %vm1264 = vcmask 261312
        %1265 = vst.msk [vmem:[#allocation2] sm:$0xff] %vm1264, %v1262
        %v1266 = vld [vmem:[#allocation2] sm:$0xff]
        %v1267 = vpack.c.bf16 %v1266, %v1266
        %v1268 = vld [vmem:[%s9] sm:$0xf]
        %v1269 = vld [vmem:[%s9 + $0x4] sm:$0xf]
        %v1270 = vld [vmem:[%s9 + $0x8] sm:$0xf]
        %v1271 = vld [vmem:[%s9 + $0xc] sm:$0xf]
        %v1272 = vld [vmem:[%s10] sm:$0x1]
        %v1274 = vlaneseq
        %v1275 = vshrl.u32 %v1274, 7
        %v1276 = vsub.s32 0, %v1275
        %v1277 = vrot.slane %v1272, %v1276
        %v1283 = vunpack.c.l.b16 %v1268
        %v1284 = vunpack.c.l.b16 %v1269
        %v1285 = vunpack.c.l.b16 %v1270
        %v1286 = vunpack.c.l.b16 %v1271
        %v1287 = vpack.c.b16 %v1284, %v1283
        %v1288 = vpack.c.b16 %v1286, %v1285
        %v1292 = vsel %vm622, %v1267, 0
        %1294 = vmatprep.subr.bf16.mxu0 0
        %1295 = vmatpush1.bf16.msra.mxu0 0
        %1296 = vmatprep.subr.bf16.mxu0 0
        %1297 = vmatpush1.bf16.msra.mxu0 0
        %1298 = vmatprep.subr.bf16.mxu0 0
        %1299 = vmatpush1.bf16.msra.mxu0 0
        %1300 = vmatprep.subr.bf16.mxu0 0
        %1301 = vmatpush1.bf16.msra.mxu0 0
        %1302 = vmatprep.subr.bf16.mxu0 0
        %1303 = vmatpush1.bf16.msra.mxu0 0
        %1304 = vmatprep.subr.bf16.mxu0 0
        %1305 = vmatpush1.bf16.msra.mxu0 0
        %1306 = vmatprep.subr.bf16.mxu0 0
        %1307 = vmatpush1.bf16.msra.mxu0 %v1288
        %1308 = vmatprep.subr.bf16.mxu0 0
        %1309 = vmatpush1.bf16.msra.mxu0 %v1287
        %1310 = vmatprep.subr.bf16.mxu0 0
        %1311 = vmatpush2.bf16.msra.mxu0 0
        %1312 = vmatprep.subr.bf16.mxu0 0
        %1313 = vmatpush2.bf16.msra.mxu0 0
        %1314 = vmatprep.subr.bf16.mxu0 0
        %1315 = vmatpush2.bf16.msra.mxu0 0
        %1316 = vmatprep.subr.bf16.mxu0 0
        %1317 = vmatpush2.bf16.msra.mxu0 0
        %1318 = vmatprep.subr.bf16.mxu0 0
        %1319 = vmatpush2.bf16.msra.mxu0 0
        %1320 = vmatprep.subr.bf16.mxu0 0
        %1321 = vmatpush2.bf16.msra.mxu0 0
        %1322 = vmatprep.subr.bf16.mxu0 0
        %1323 = vmatpush2.bf16.msra.mxu0 0
        %1324 = vmatprep.subr.bf16.mxu0 0
        %1325 = vmatpush2.bf16.msra.mxu0 0
        %1326 = vmatprep.mubr.bf16.mxu0 0
        %1327 = vmatmul.mubr.bf16.gmra.mxu0 %v1292
        %v1328 = vpop.f32.mrf.mxu0
        %v1329 = vadd.f32 %v1277, %v1328
        %v1330 = vpop.f32.mrf.mxu0
        %v1331 = vpop.f32.mrf.mxu0
        %v1332 = vpop.f32.mrf.mxu0
        %1333 = vdwg.mxu0
        %1334 = vst.msk [vmem:[%s584] sm:$0xff] %vm622, %v1329
        %s1335 = sand.u32 %s293, 1
        %s1336 = scalar_lea.sflag [#allocation5], %s1335
        %s1337 = sand.u32 %s293, 1
        %s1338 = smul.addr %s1337, 8
        %s1339 = scalar_lea.vmem [#allocation18], %s1338
        %s1340 = sand.u32 %s319, 1
        %s1341 = scalar_lea.sflag [#allocation20], %s1340
        %s1342 = sand.u32 %s319, 1
        %s1343 = smul.addr %s1342, 32
        %s1344 = scalar_lea.vmem [#allocation19], %s1343
        // Predicated region
        $region101: #{tpu_custom_call.1} parent=63 // pred_check
          %p1345 = pneg %p303
        $region102: #{tpu_custom_call.1} parent=63 // pred_check_branch
          %1347 = sbr.rel (%p1345) target = $region104
        $region103: #{tpu_custom_call.1} parent=63 // pred_region
          %s1349 = ssub.s32 128, 128
          %1350 = vsyncadd %s1336, %s1349
          %s1351 = smul.addr %s39, 128
          %s1352 = scalar_lea.hbm %s11, %s1351
          %s1354 = sshll.u32 %s1339, 4
          %s1355 = int_to_ptr.vmem [resolvable:$true] %s1354
          %1357 = dma.vmem_to_hbm [thread:$0]  %s1355, 128, %s1352, %s1336
        $region104: #{tpu_custom_call.1} parent=63 // pred_fallthru
          _
        // Predicated region
        $region105: #{tpu_custom_call.1} parent=63 // pred_check
          %p1358 = pneg %p329
        $region106: #{tpu_custom_call.1} parent=63 // pred_check_branch
          %1360 = sbr.rel (%p1358) target = $region108
        $region107: #{tpu_custom_call.1} parent=63 // pred_region
          %s1362 = ssub.s32 512, 512
          %1363 = vsyncadd %s1341, %s1362
          %s1364 = smul.addr %s39, 4
          %s1365 = smul.addr %s1364, 128
          %s1366 = scalar_lea.hbm %s12, %s1365
          %s1367 = sshll.u32 %s1344, 4
          %s1368 = int_to_ptr.vmem [resolvable:$true] %s1367
          %1373 = dma.vmem_to_hbm [thread:$0]  %s1368, 512, %s1366, %s1341, 128, 128, 8
        $region108: #{tpu_custom_call.1} parent=63 // pred_fallthru
          _
      $region64: #{tpu_custom_call.1} parent=5 // pred_fallthru
        _
      %p1374 = scmp.le.s32.totalorder 2, %s34
      // Predicated region
      $region109: #{tpu_custom_call.1} parent=5 // pred_check
        %p1375 = pneg %p1374
      $region110: #{tpu_custom_call.1} parent=5 // pred_check_branch
        %1377 = sbr.rel (%p1375) target = $region112
      $region111: #{tpu_custom_call.1} parent=5 // pred_region
        %s1378 = ssub.s32 %s34, 2
        // Predicated region
        $region113: #{tpu_custom_call.1} parent=111 // pred_check
          %p1379 = pneg %p309
        $region114: #{tpu_custom_call.1} parent=111 // pred_check_branch
          %1381 = sbr.rel (%p1379) target = $region116
        $region115: #{tpu_custom_call.1} parent=111 // pred_region
          %s1382 = sand.u32 %s294, 1
          %s1383 = scalar_lea.sflag [#allocation5], %s1382
          %s1384 = sand.u32 %s294, 1
          %s1385 = smul.addr %s1384, 8
          %s1386 = scalar_lea.vmem [#allocation18], %s1385
          %1387 = dma.done %s1383, 128
        $region116: #{tpu_custom_call.1} parent=111 // pred_fallthru
          _
        // Predicated region
        $region117: #{tpu_custom_call.1} parent=111 // pred_check
          %p1388 = pneg %p335
        $region118: #{tpu_custom_call.1} parent=111 // pred_check_branch
          %1390 = sbr.rel (%p1388) target = $region120
        $region119: #{tpu_custom_call.1} parent=111 // pred_region
          %s1391 = sand.u32 %s320, 1
          %s1392 = scalar_lea.sflag [#allocation20], %s1391
          %s1393 = sand.u32 %s320, 1
          %s1394 = smul.addr %s1393, 32
          %s1395 = scalar_lea.vmem [#allocation19], %s1394
          %1396 = dma.done %s1392, 512
        $region120: #{tpu_custom_call.1} parent=111 // pred_fallthru
          _
      $region112: #{tpu_custom_call.1} parent=5 // pred_fallthru
        _
    $region6: #{tpu_custom_call.1} parent=1 // loop_footer
      %s38 = sadd.s32 1, %s34
    $region7: #{tpu_custom_call.1} parent=1 // loop_footer_branch
      %33 = sbr.rel target = $region3
    $region8: #{tpu_custom_call.1} parent=1 // loop_exit
      _
    %1397 = vsyncpa [#allocation4], 1
    %s1398 = scalar_lea.sflag [#allocation4], 1
    %1399 = vsyncpa %s1398, 1
    %1400 = vsyncpa [#allocation7], 1
    %s1401 = scalar_lea.sflag [#allocation7], 1
    %1402 = vsyncpa %s1401, 1
    %1403 = vsyncpa [#allocation10], 1
    %1404 = vsyncpa [#allocation13], 1
    %1405 = vsyncpa [#allocation16], 1
    %1406 = vsyncpa [#allocation5], 1
    %s1407 = scalar_lea.sflag [#allocation5], 1
    %1408 = vsyncpa %s1407, 1
    %1409 = vsyncpa [#allocation20], 1
    %s1410 = scalar_lea.sflag [#allocation20], 1
    %1411 = vsyncpa %s1410, 1

</llo_original>
